<compile_context>
chip_gen: v6e
topology: v6e:2x2x1
jax: 0.10.0
libtpu: 0.0.40
codegen_flags: <defaults>
</compile_context>

<pallas_src>
import jax
import jax.numpy as jnp
from jax.experimental import pallas as pl
from jax.experimental.pallas import tpu as pltpu


def _round_up(n: int, m: int) -> int:
    return -(-n // m) * m


def _choose_batch_tile(set_size, din, dout_p, in_itemsize,
                       budget_bytes=16 * 1024 * 1024, max_tile=512):
    """Largest batch tile (multiple of 8, capped) whose double-buffered working
    set fits comfortably under the scoped-VMEM budget on every generation
    (v7x only has 64 MiB physical / 32 MiB default scoped VMEM per TC)."""
    resident = (din + 1) * dout_p * 4                       # weight + bias (f32 bound)
    per_row = (2 * in_itemsize * din * (1 + 2 * set_size)   # x/pos/neg, double-buffered
               + 2 * 3 * dout_p * 4)                        # 3 f32 outputs, double-buffered
    tb = (budget_bytes - resident) // max(per_row, 1)
    tb = int(max(8, min(tb, max_tile)))
    return (tb // 8) * 8


def prod2vec_kernel(x_ref, pos_ref, neg_ref, w_ref, b_ref,
                    x_out_ref, pos_out_ref, neg_out_ref):
    tb, s, din = pos_ref.shape
    w = w_ref[...]                        # [Din, Dp]   (Dp = Dout padded to k*128)
    b = b_ref[...]                        # [1,   Dp]   float32

    # ---- query-item embedding: [tb, Din] @ [Din, Dp] on the MXU ----------------
    x_emb = jnp.dot(x_ref[...], w, preferred_element_type=jnp.float32) + b
    x_out_ref[...] = x_emb.astype(x_out_ref.dtype)

    # ---- fused set linear: positive & negative in ONE large-M MXU matmul -------
    # (amortizes the weight push into the systolic array and the result-FIFO
    #  drain across both sets instead of paying it per set.)
    sets2d = jnp.concatenate(
        [pos_ref[...].reshape(tb * s, din),
         neg_ref[...].reshape(tb * s, din)], axis=0)        # [2*tb*s, Din]
    sets_emb = jnp.dot(sets2d, w, preferred_element_type=jnp.float32) + b
    dp = sets_emb.shape[-1]
    pos_emb = sets_emb[:tb * s].reshape(tb, s, dp)
    neg_emb = sets_emb[tb * s:].reshape(tb, s, dp)

    def attention_agg(set_emb):
        # scores[b, t] = <x_emb[b], set_emb[b, t]>.  Dp is a single lane-vreg per
        # sublane row, so the VPU multiply + lane reduce is cheap here and is
        # guaranteed to lower (a batched mat-vec on the MXU would have degenerate
        # free dims).  Softmax over the set axis, numerically stable, f32.
        scores = jnp.sum(x_emb[:, None, :] * set_emb, axis=2)           # [tb, s]
        scores = scores - jnp.max(scores, axis=1, keepdims=True)
        e = jnp.exp(scores)
        inv = pl.reciprocal(jnp.sum(e, axis=1, keepdims=True), approx=True)  # EUP vrcp
        attn = e * inv
        return jnp.sum(set_emb * attn[:, :, None], axis=1)              # [tb, Dp]

    pos_out_ref[...] = attention_agg(pos_emb).astype(pos_out_ref.dtype)
    neg_out_ref[...] = attention_agg(neg_emb).astype(neg_out_ref.dtype)


def prod2vec_forward(x, positive, negative, weight, bias, *,
                     tb=None, compute_dtype=None):
    """Fused Prod2Vec forward pass. Returns (x_emb, pos_agg, neg_agg), [B, Dout] f32."""
    B, Din = x.shape
    S = positive.shape[1]
    Dout = weight.shape[1]

    # --- lane-dense outputs: pad Dout up to a multiple of 128 (zero columns) ----
    dp = _round_up(max(Dout, 1), 128)
    if dp != Dout:
        weight = jnp.pad(weight, ((0, 0), (0, dp - Dout)))
        bias = jnp.pad(bias, ((0, 0), (0, dp - Dout)))
    bias = bias.astype(jnp.float32)        # bias is added after f32 accumulation

    # Optional bf16 MXU operands (v6e/v7x): halves HBM bytes for the dominant
    # [B, S, Din] traffic; accumulation stays f32 via preferred_element_type.
    if compute_dtype is not None:
        x = x.astype(compute_dtype)
        positive = positive.astype(compute_dtype)
        negative = negative.astype(compute_dtype)
        weight = weight.astype(compute_dtype)

    in_itemsize = x.dtype.itemsize

    # --- batch tile selection + ragged-batch padding ----------------------------
    if tb is None:
        tb = _choose_batch_tile(S, Din, dp, in_itemsize)
    if B <= tb:
        tb, Bp = B, B                       # single tile; block equals full batch
    else:
        tb = max(8, (tb // 8) * 8)          # (8, 128) sublane alignment
        Bp = _round_up(B, tb)
    if Bp != B:                             # zero rows are harmless; sliced off below
        x = jnp.pad(x, ((0, Bp - B), (0, 0)))
        positive = jnp.pad(positive, ((0, Bp - B), (0, 0), (0, 0)))
        negative = jnp.pad(negative, ((0, Bp - B), (0, 0), (0, 0)))

    grid = (Bp // tb,)
    out_sd = jax.ShapeDtypeStruct((Bp, dp), jnp.float32)

    grid_spec = pltpu.PrefetchScalarGridSpec(
        num_scalar_prefetch=0,
        grid=grid,
        in_specs=[
            pl.BlockSpec((tb, Din), lambda i: (i, 0)),        # x tile
            pl.BlockSpec((tb, S, Din), lambda i: (i, 0, 0)),  # positive tile
            pl.BlockSpec((tb, S, Din), lambda i: (i, 0, 0)),  # negative tile
            pl.BlockSpec((Din, dp), lambda i: (0, 0)),        # weight: VMEM-resident
            pl.BlockSpec((1, dp), lambda i: (0, 0)),          # bias:   VMEM-resident
        ],
        out_specs=[
            pl.BlockSpec((tb, dp), lambda i: (i, 0)),
            pl.BlockSpec((tb, dp), lambda i: (i, 0)),
            pl.BlockSpec((tb, dp), lambda i: (i, 0)),
        ],
    )

    cost = pl.CostEstimate(
        flops=int(2 * (Bp + 2 * Bp * S) * Din * dp + 8 * Bp * S * dp),
        transcendentals=int(2 * Bp * S),
        bytes_accessed=int(
            (x.size + positive.size + negative.size) * in_itemsize
            + weight.size * weight.dtype.itemsize + bias.size * 4
            + 3 * Bp * dp * 4),
    )

    x_emb, pos_agg, neg_agg = pl.pallas_call(
        prod2vec_kernel,
        out_shape=(out_sd, out_sd, out_sd),
        grid_spec=grid_spec,
        compiler_params=pltpu.CompilerParams(
            dimension_semantics=("parallel",),   # batch tiles shard across TCs (v7x)
            vmem_limit_bytes=32 * 1024 * 1024,
        ),
        cost_estimate=cost,
    )(x, positive, negative, weight, bias)

    # Strip batch / Dout padding.
    return x_emb[:B, :Dout], pos_agg[:B, :Dout], neg_agg[:B, :Dout]


def prod2vec_reference(x, positive, negative, weight, bias):
    x_emb = x @ weight + bias

    def agg(set_j):
        set_emb = jnp.einsum("bsd,de->bse", set_j, weight) + bias[None, :, :]
        scores = jnp.sum(x_emb[:, None, :] * set_emb, axis=2)
        attn = jax.nn.softmax(scores, axis=1)
        return jnp.sum(set_emb * attn[:, :, None], axis=1)

    return x_emb, agg(positive), agg(negative)


if __name__ == "__main__":
    B, S, Din, Dout = 16, 8, 32, 16

    key = jax.random.PRNGKey(0)
    kx, kp, kn, kw, kb = jax.random.split(key, 5)
    x        = jax.random.normal(kx, (B, Din), dtype=jnp.float32)
    positive = jax.random.normal(kp, (B, S, Din), dtype=jnp.float32)
    negative = jax.random.normal(kn, (B, S, Din), dtype=jnp.float32)
    # Deterministic synthetic Linear(Din, Dout) parameters.
    weight   = jax.random.normal(kw, (Din, Dout), dtype=jnp.float32) / jnp.sqrt(Din)
    bias     = jax.random.normal(kb, (1, Dout), dtype=jnp.float32) * 0.1

    # tb=8 forces a multi-step batch grid even at this small demo size so the
    # pipelined BlockSpec path (grid=(2,)) is exercised.
    x_emb, pos_agg, neg_agg = prod2vec_forward(
        x, positive, negative, weight, bias, tb=8)
    jax.block_until_ready((x_emb, pos_agg, neg_agg))

    # Sanity check against pure-JAX reference.
    rx, rp, rn = prod2vec_reference(x, positive, negative, weight, bias)
    assert x_emb.shape == (B, Dout) and pos_agg.shape == (B, Dout) and neg_agg.shape == (B, Dout)
    assert jnp.allclose(x_emb, rx, atol=1e-5, rtol=1e-5)
    # The softmax denominator uses the EUP approximate reciprocal (approx=True),
    # so the aggregated outputs are validated with a slightly looser tolerance.
    assert jnp.allclose(pos_agg, rp, atol=5e-2, rtol=5e-2)
    assert jnp.allclose(neg_agg, rn, atol=5e-2, rtol=5e-2)

    print("KERNEL_OK")
</pallas_src>

<mosaic_0001>
module attributes {stable_mosaic.version = 11 : i64} {
  func.func @prod2vec_kernel(%arg0: i32, %arg1: memref<8x32xf32, #tpu.memory_space<vmem>>, %arg2: memref<8x8x32xf32, #tpu.memory_space<vmem>>, %arg3: memref<8x8x32xf32, #tpu.memory_space<vmem>>, %arg4: memref<32x128xf32, #tpu.memory_space<vmem>>, %arg5: memref<1x128xf32, #tpu.memory_space<vmem>>, %arg6: memref<8x128xf32, #tpu.memory_space<vmem>>, %arg7: memref<8x128xf32, #tpu.memory_space<vmem>>, %arg8: memref<8x128xf32, #tpu.memory_space<vmem>>) attributes {dimension_semantics = [#tpu.dimension_semantics<parallel>], iteration_bounds = array<i64: 2>, scalar_prefetch = 0 : i64, scratch_operands = 0 : i64, tpu.core_type = #tpu.core_type<tc>, window_params = [{transform_indices = @transform_0, window_bounds = array<i64: 8, 32>}, {transform_indices = @transform_1, window_bounds = array<i64: 8, 8, 32>}, {transform_indices = @transform_2, window_bounds = array<i64: 8, 8, 32>}, {pipeline_mode = #tpu.pipeline_mode<synchronous>, transform_indices = @transform_3, window_bounds = array<i64: 32, 128>}, {pipeline_mode = #tpu.pipeline_mode<synchronous>, transform_indices = @transform_4, window_bounds = array<i64: 1, 128>}, {transform_indices = @transform_5, window_bounds = array<i64: 8, 128>}, {transform_indices = @transform_6, window_bounds = array<i64: 8, 128>}, {transform_indices = @transform_7, window_bounds = array<i64: 8, 128>}]} {
    %c0 = arith.constant 0 : index
    %c0_0 = arith.constant 0 : index
    %0 = vector.load %arg4[%c0, %c0_0] : memref<32x128xf32, #tpu.memory_space<vmem>>, vector<32x128xf32>
    %c0_1 = arith.constant 0 : index
    %c0_2 = arith.constant 0 : index
    %1 = vector.load %arg5[%c0_1, %c0_2] : memref<1x128xf32, #tpu.memory_space<vmem>>, vector<1x128xf32>
    %c0_3 = arith.constant 0 : index
    %c0_4 = arith.constant 0 : index
    %2 = vector.load %arg1[%c0_3, %c0_4] : memref<8x32xf32, #tpu.memory_space<vmem>>, vector<8x32xf32>
    %cst = arith.constant dense<0.000000e+00> : vector<8x128xf32>
    %3 = tpu.matmul %2, %0, %cst {dimension_numbers = #tpu.dot_dimension_numbers<[1], [0], [0], [1], [0, 0, 1, 1], [], []>} : vector<8x32xf32>, vector<32x128xf32>, vector<8x128xf32> -> vector<8x128xf32>
    %4 = vector.broadcast %1 : vector<1x128xf32> to vector<8x128xf32>
    %5 = arith.addf %3, %4 : vector<8x128xf32>
    %c0_5 = arith.constant 0 : index
    %c0_6 = arith.constant 0 : index
    %6 = vector.load %arg6[%c0_5, %c0_6] : memref<8x128xf32, #tpu.memory_space<vmem>>, vector<8x128xf32>
    tpu.vector_store %arg6[%c0_5, %c0_6], %5 {strides = array<i32>} : memref<8x128xf32, #tpu.memory_space<vmem>>, vector<8x128xf32>,
    %c0_7 = arith.constant 0 : index
    %c0_8 = arith.constant 0 : index
    %c0_9 = arith.constant 0 : index
    %7 = vector.load %arg2[%c0_7, %c0_8, %c0_9] : memref<8x8x32xf32, #tpu.memory_space<vmem>>, vector<8x8x32xf32>
    %8 = vector.shape_cast %7 : vector<8x8x32xf32> to vector<64x32xf32>
    %c0_10 = arith.constant 0 : index
    %c0_11 = arith.constant 0 : index
    %c0_12 = arith.constant 0 : index
    %9 = vector.load %arg3[%c0_10, %c0_11, %c0_12] : memref<8x8x32xf32, #tpu.memory_space<vmem>>, vector<8x8x32xf32>
    %10 = vector.shape_cast %9 : vector<8x8x32xf32> to vector<64x32xf32>
    %11 = tpu.concatenate %8, %10 in 0 : vector<64x32xf32>, vector<64x32xf32> -> vector<128x32xf32>
    %cst_13 = arith.constant dense<0.000000e+00> : vector<128x128xf32>
    %12 = tpu.matmul %11, %0, %cst_13 {dimension_numbers = #tpu.dot_dimension_numbers<[1], [0], [0], [1], [0, 0, 1, 1], [], []>} : vector<128x32xf32>, vector<32x128xf32>, vector<128x128xf32> -> vector<128x128xf32>
    %13 = vector.broadcast %1 : vector<1x128xf32> to vector<128x128xf32>
    %14 = arith.addf %12, %13 : vector<128x128xf32>
    %15 = vector.extract_strided_slice %14 {offsets = [0, 0], sizes = [64, 128], strides = [1, 1]} : vector<128x128xf32> to vector<64x128xf32>
    %16 = vector.shape_cast %15 : vector<64x128xf32> to vector<8x8x128xf32>
    %17 = vector.extract_strided_slice %14 {offsets = [64, 0], sizes = [64, 128], strides = [1, 1]} : vector<128x128xf32> to vector<64x128xf32>
    %18 = vector.shape_cast %17 : vector<64x128xf32> to vector<8x8x128xf32>
    %19 = vector.shape_cast %5 : vector<8x128xf32> to vector<8x1x128xf32>
    %20 = vector.broadcast %19 : vector<8x1x128xf32> to vector<8x8x128xf32>
    %21 = arith.mulf %20, %16 : vector<8x8x128xf32>
    %cst_14 = arith.constant dense<0.000000e+00> : vector<8x8xf32>
    %22 = vector.multi_reduction <add>, %21, %cst_14 [2] : vector<8x8x128xf32> to vector<8x8xf32>
    %cst_15 = arith.constant dense<0xFF800000> : vector<8xf32>
    %23 = vector.multi_reduction <maximumf>, %22, %cst_15 [1] : vector<8x8xf32> to vector<8xf32>
    %24 = vector.shape_cast %23 : vector<8xf32> to vector<8x1xf32>
    %25 = vector.broadcast %24 : vector<8x1xf32> to vector<8x8xf32>
    %26 = arith.subf %22, %25 : vector<8x8xf32>
    %27 = math.exp %26 : vector<8x8xf32>
    %cst_16 = arith.constant dense<0.000000e+00> : vector<8xf32>
    %28 = vector.multi_reduction <add>, %27, %cst_16 [1] : vector<8x8xf32> to vector<8xf32>
    %29 = vector.shape_cast %28 : vector<8xf32> to vector<8x1xf32>
    %30 = tpu.reciprocal %29 {approx = true} : vector<8x1xf32> -> vector<8x1xf32>
    %31 = vector.broadcast %30 : vector<8x1xf32> to vector<8x8xf32>
    %32 = arith.mulf %27, %31 : vector<8x8xf32>
    %33 = vector.shape_cast %32 : vector<8x8xf32> to vector<8x8x1xf32>
    %34 = vector.broadcast %33 : vector<8x8x1xf32> to vector<8x8x128xf32>
    %35 = arith.mulf %16, %34 : vector<8x8x128xf32>
    %cst_17 = arith.constant dense<0.000000e+00> : vector<8x128xf32>
    %36 = vector.multi_reduction <add>, %35, %cst_17 [1] : vector<8x8x128xf32> to vector<8x128xf32>
    %c0_18 = arith.constant 0 : index
    %c0_19 = arith.constant 0 : index
    %37 = vector.load %arg7[%c0_18, %c0_19] : memref<8x128xf32, #tpu.memory_space<vmem>>, vector<8x128xf32>
    tpu.vector_store %arg7[%c0_18, %c0_19], %36 {strides = array<i32>} : memref<8x128xf32, #tpu.memory_space<vmem>>, vector<8x128xf32>,
    %38 = vector.shape_cast %5 : vector<8x128xf32> to vector<8x1x128xf32>
    %39 = vector.broadcast %38 : vector<8x1x128xf32> to vector<8x8x128xf32>
    %40 = arith.mulf %39, %18 : vector<8x8x128xf32>
    %cst_20 = arith.constant dense<0.000000e+00> : vector<8x8xf32>
    %41 = vector.multi_reduction <add>, %40, %cst_20 [2] : vector<8x8x128xf32> to vector<8x8xf32>
    %cst_21 = arith.constant dense<0xFF800000> : vector<8xf32>
    %42 = vector.multi_reduction <maximumf>, %41, %cst_21 [1] : vector<8x8xf32> to vector<8xf32>
    %43 = vector.shape_cast %42 : vector<8xf32> to vector<8x1xf32>
    %44 = vector.broadcast %43 : vector<8x1xf32> to vector<8x8xf32>
    %45 = arith.subf %41, %44 : vector<8x8xf32>
    %46 = math.exp %45 : vector<8x8xf32>
    %cst_22 = arith.constant dense<0.000000e+00> : vector<8xf32>
    %47 = vector.multi_reduction <add>, %46, %cst_22 [1] : vector<8x8xf32> to vector<8xf32>
    %48 = vector.shape_cast %47 : vector<8xf32> to vector<8x1xf32>
    %49 = tpu.reciprocal %48 {approx = true} : vector<8x1xf32> -> vector<8x1xf32>
    %50 = vector.broadcast %49 : vector<8x1xf32> to vector<8x8xf32>
    %51 = arith.mulf %46, %50 : vector<8x8xf32>
    %52 = vector.shape_cast %51 : vector<8x8xf32> to vector<8x8x1xf32>
    %53 = vector.broadcast %52 : vector<8x8x1xf32> to vector<8x8x128xf32>
    %54 = arith.mulf %18, %53 : vector<8x8x128xf32>
    %cst_23 = arith.constant dense<0.000000e+00> : vector<8x128xf32>
    %55 = vector.multi_reduction <add>, %54, %cst_23 [1] : vector<8x8x128xf32> to vector<8x128xf32>
    %c0_24 = arith.constant 0 : index
    %c0_25 = arith.constant 0 : index
    %56 = vector.load %arg8[%c0_24, %c0_25] : memref<8x128xf32, #tpu.memory_space<vmem>>, vector<8x128xf32>
    tpu.vector_store %arg8[%c0_24, %c0_25], %55 {strides = array<i32>} : memref<8x128xf32, #tpu.memory_space<vmem>>, vector<8x128xf32>,
    return
  }
  func.func @transform_0(%arg0: i32) -> (i32, i32) {
    %c0_i32 = arith.constant 0 : i32
    %c0_i32_0 = arith.constant 0 : i32
    return %arg0, %c0_i32 : i32, i32
  }
  func.func @transform_1(%arg0: i32) -> (i32, i32, i32) {
    %c0_i32 = arith.constant 0 : i32
    %c0_i32_0 = arith.constant 0 : i32
    %c0_i32_1 = arith.constant 0 : i32
    return %arg0, %c0_i32, %c0_i32_0 : i32, i32, i32
  }
  func.func @transform_2(%arg0: i32) -> (i32, i32, i32) {
    %c0_i32 = arith.constant 0 : i32
    %c0_i32_0 = arith.constant 0 : i32
    %c0_i32_1 = arith.constant 0 : i32
    return %arg0, %c0_i32, %c0_i32_0 : i32, i32, i32
  }
  func.func @transform_3(%arg0: i32) -> (i32, i32) {
    %c0_i32 = arith.constant 0 : i32
    %c0_i32_0 = arith.constant 0 : i32
    %c0_i32_1 = arith.constant 0 : i32
    return %c0_i32, %c0_i32_0 : i32, i32
  }
  func.func @transform_4(%arg0: i32) -> (i32, i32) {
    %c0_i32 = arith.constant 0 : i32
    %c0_i32_0 = arith.constant 0 : i32
    %c0_i32_1 = arith.constant 0 : i32
    return %c0_i32, %c0_i32_0 : i32, i32
  }
  func.func @transform_5(%arg0: i32) -> (i32, i32) {
    %c0_i32 = arith.constant 0 : i32
    %c0_i32_0 = arith.constant 0 : i32
    return %arg0, %c0_i32 : i32, i32
  }
  func.func @transform_6(%arg0: i32) -> (i32, i32) {
    %c0_i32 = arith.constant 0 : i32
    %c0_i32_0 = arith.constant 0 : i32
    return %arg0, %c0_i32 : i32, i32
  }
  func.func @transform_7(%arg0: i32) -> (i32, i32) {
    %c0_i32 = arith.constant 0 : i32
    %c0_i32_0 = arith.constant 0 : i32
    return %arg0, %c0_i32 : i32, i32
  }
}

</mosaic_0001>

<llo_original>
// kernel: tpu_custom_call.1
$region0: #{tpu_custom_call.1}
  #allocation0 [shape = 'u32[]', space=smem, size = 0x4, offset = 0x4, fixed_abs, tag = 'smem constant byte address 0x4 - core index']
  #allocation1 [shape = 'u32[144,128]{1,0:T(1,128)}', space=vmem, size = 0x12000, scoped, tag = 'internal scratch']
  %s0 = inlined_call_operand.hbm [shape: f32[16,32], index: 0, kind: input, shape index: {}]
  %s1 = inlined_call_operand.hbm [shape: f32[16,8,32], index: 1, kind: input, shape index: {}]
  %s2 = inlined_call_operand.hbm [shape: f32[16,8,32], index: 2, kind: input, shape index: {}]
  %s3 = inlined_call_operand.hbm [shape: f32[32,128], index: 3, kind: input, shape index: {}]
  %s4 = inlined_call_operand.vmem [shape: f32[1,128], index: 4, kind: input, shape index: {}]
  %s5 = inlined_call_operand.hbm [shape: f32[16,128], index: 5, kind: output, shape index: {0}]
  %s6 = inlined_call_operand.hbm [shape: f32[16,128], index: 6, kind: output, shape index: {1}]
  %s7 = inlined_call_operand.hbm [shape: f32[16,128], index: 7, kind: output, shape index: {2}]
  %8 = xla_tuple %s5, %s6, %s7
  %s9 = sld [smem:[#allocation0]]
  $region85: #{tpu_custom_call.1} parent=0
    _
  %s11 = ssub.s32 1, %s9
  %s12 = scalar_select 0, %s11, %s9
  $region1: #{tpu_custom_call.1} parent=0
    #allocation2 [shape = 'u8[8192]{0}', space=vmem, size = 0x2000, scoped, tag = 'input window, operand 0']
    #allocation3 [shape = 's32[2]{0}', space=sflag, size = 0x8, scoped, tag = 'scoped memory for tpu_custom_call.1']
    #allocation4 [shape = 's32[2]{0}', space=sflag, size = 0x8, scoped, tag = 'scoped memory for tpu_custom_call.1']
    #allocation5 [shape = 'u8[65536]{0}', space=vmem, size = 0x10000, scoped, tag = 'input window, operand 1']
    #allocation6 [shape = 's32[2]{0}', space=sflag, size = 0x8, scoped, tag = 'scoped memory for tpu_custom_call.1']
    #allocation7 [shape = 'u8[65536]{0}', space=vmem, size = 0x10000, scoped, tag = 'input window, operand 2']
    #allocation8 [shape = 'u8[16384]{0}', space=vmem, size = 0x4000, scoped, tag = 'input window, operand 3, single buffered']
    #allocation9 [shape = 's32[1]{0}', space=sflag, size = 0x4, scoped, tag = 'scoped memory for tpu_custom_call.1']
    #allocation10 [shape = 'u8[8192]{0}', space=vmem, size = 0x2000, scoped, tag = 'output window, operand 0']
    #allocation11 [shape = 'u8[8192]{0}', space=vmem, size = 0x2000, scoped, tag = 'output window, operand 1']
    #allocation12 [shape = 's32[2]{0}', space=sflag, size = 0x8, scoped, tag = 'scoped memory for tpu_custom_call.1']
    #allocation13 [shape = 'u8[8192]{0}', space=vmem, size = 0x2000, scoped, tag = 'output window, operand 2']
    %13 = vsyncpa [#allocation3], 0
    %s14 = scalar_lea.sflag [#allocation3], 1
    %15 = vsyncpa %s14, 0
    %16 = vsyncpa [#allocation6], 0
    %s17 = scalar_lea.sflag [#allocation6], 1
    %18 = vsyncpa %s17, 0
    %19 = vsyncpa [#allocation9], 0
    %20 = vsyncpa [#allocation4], 0
    %s21 = scalar_lea.sflag [#allocation4], 1
    %22 = vsyncpa %s21, 0
    %23 = vsyncpa [#allocation12], 0
    %s24 = scalar_lea.sflag [#allocation12], 1
    %25 = vsyncpa %s24, 0
    loop: start=0, step=1, limit=4
    $region2: #{tpu_custom_call.1} parent=1 // loop_pre_header
      _
    $region3: #{tpu_custom_call.1} parent=1 // loop_header
      %s27 = sphi 0, %s31
      %p28 = scmp.ge.s32.totalorder %s27, 4
      %s37 = sphi 0, %s39
      %s40 = sphi 0, %s37
      %s41 = sphi 0, %s40
      %s57 = sphi 0, %s41
      %s63 = sphi 0, %s65
      %s66 = sphi 0, %s63
      %s67 = sphi 0, %s66
      %s83 = sphi 0, %s67
      %s89 = sphi 0, %s91
      %s92 = sphi 0, %s89
      %s93 = sphi 0, %s92
      %s109 = sphi 0, %s93
      %s113 = sphi 0, %s113
      %s115 = sphi 0, %s113
      %s116 = sphi 0, %s115
      %s130 = sphi 0, %s116
      %s134 = sphi 0, %s134
      %s136 = sphi 0, %s134
      %s137 = sphi 0, %s136
      %s151 = sphi 0, %s137
      %s157 = sphi 0, %s159
      %s160 = sphi 0, %s157
      %s161 = sphi 0, %s160
      %s177 = sphi 0, %s161
      %s183 = sphi 0, %s185
      %s186 = sphi 0, %s183
      %s187 = sphi 0, %s186
      %s203 = sphi 0, %s187
      %s209 = sphi 0, %s211
      %s212 = sphi 0, %s209
      %s213 = sphi 0, %s212
      %s229 = sphi 0, %s213
    $region4: #{tpu_custom_call.1} parent=1 // loop_header_branch
      %30 = sbr.rel (%p28) target = $region8
    $region5: #{tpu_custom_call.1} parent=1 // loop_body
      %s32 = ssub.s32 %s27, 1
      %s33 = ssub.s32 %s27, 2
      %s34 = sadd.s32 %s27, 1
      %s35 = ssub.s32 %s27, %s34
      %p36 = scmp.eq.s32.totalorder %s35, 0
      %s38 = sadd.s32 %s37, 1
      %s39 = scalar_select %p36, %s37, %s38
      %p42 = pneg %p36
      %p43 = scmp.eq.s32.totalorder %s27, 1
      %p44 = por %p42, %p43
      %p45 = scmp.ne.s32.totalorder %s37, %s40
      %p46 = scmp.eq.s32.totalorder %s27, 0
      %p47 = por %p45, %p46
      %p48 = scmp.ne.s32.totalorder %s37, %s40
      %p49 = scmp.eq.s32.totalorder %s32, 1
      %p50 = por %p48, %p49
      %p51 = scmp.ne.s32.totalorder %s40, %s41
      %p52 = scmp.eq.s32.totalorder %s32, 0
      %p53 = por %p51, %p52
      %p54 = scmp.ne.s32.totalorder %s40, %s41
      %p55 = scmp.eq.s32.totalorder %s33, 1
      %p56 = por %p54, %p55
      %p58 = scmp.ne.s32.totalorder %s41, %s57
      %p59 = scmp.eq.s32.totalorder %s33, 0
      %p60 = por %p58, %p59
      %s61 = ssub.s32 %s27, %s34
      %p62 = scmp.eq.s32.totalorder %s61, 0
      %s64 = sadd.s32 %s63, 1
      %s65 = scalar_select %p62, %s63, %s64
      %p68 = pneg %p62
      %p69 = scmp.eq.s32.totalorder %s27, 1
      %p70 = por %p68, %p69
      %p71 = scmp.ne.s32.totalorder %s63, %s66
      %p72 = scmp.eq.s32.totalorder %s27, 0
      %p73 = por %p71, %p72
      %p74 = scmp.ne.s32.totalorder %s63, %s66
      %p75 = scmp.eq.s32.totalorder %s32, 1
      %p76 = por %p74, %p75
      %p77 = scmp.ne.s32.totalorder %s66, %s67
      %p78 = scmp.eq.s32.totalorder %s32, 0
      %p79 = por %p77, %p78
      %p80 = scmp.ne.s32.totalorder %s66, %s67
      %p81 = scmp.eq.s32.totalorder %s33, 1
      %p82 = por %p80, %p81
      %p84 = scmp.ne.s32.totalorder %s67, %s83
      %p85 = scmp.eq.s32.totalorder %s33, 0
      %p86 = por %p84, %p85
      %s87 = ssub.s32 %s27, %s34
      %p88 = scmp.eq.s32.totalorder %s87, 0
      %s90 = sadd.s32 %s89, 1
      %s91 = scalar_select %p88, %s89, %s90
      %p94 = pneg %p88
      %p95 = scmp.eq.s32.totalorder %s27, 1
      %p96 = por %p94, %p95
      %p97 = scmp.ne.s32.totalorder %s89, %s92
      %p98 = scmp.eq.s32.totalorder %s27, 0
      %p99 = por %p97, %p98
      %p100 = scmp.ne.s32.totalorder %s89, %s92
      %p101 = scmp.eq.s32.totalorder %s32, 1
      %p102 = por %p100, %p101
      %p103 = scmp.ne.s32.totalorder %s92, %s93
      %p104 = scmp.eq.s32.totalorder %s32, 0
      %p105 = por %p103, %p104
      %p106 = scmp.ne.s32.totalorder %s92, %s93
      %p107 = scmp.eq.s32.totalorder %s33, 1
      %p108 = por %p106, %p107
      %p110 = scmp.ne.s32.totalorder %s93, %s109
      %p111 = scmp.eq.s32.totalorder %s33, 0
      %p112 = por %p110, %p111
      %s114 = sadd.s32 %s113, 1
      %p117 = scmp.eq.s32.totalorder %s27, 1
      %p118 = scmp.ne.s32.totalorder %s113, %s115
      %p119 = scmp.eq.s32.totalorder %s27, 0
      %p120 = por %p118, %p119
      %p121 = scmp.ne.s32.totalorder %s113, %s115
      %p122 = scmp.eq.s32.totalorder %s32, 1
      %p123 = por %p121, %p122
      %p124 = scmp.ne.s32.totalorder %s115, %s116
      %p125 = scmp.eq.s32.totalorder %s32, 0
      %p126 = por %p124, %p125
      %p127 = scmp.ne.s32.totalorder %s115, %s116
      %p128 = scmp.eq.s32.totalorder %s33, 1
      %p129 = por %p127, %p128
      %p131 = scmp.ne.s32.totalorder %s116, %s130
      %p132 = scmp.eq.s32.totalorder %s33, 0
      %p133 = por %p131, %p132
      %s135 = sadd.s32 %s134, 1
      %p138 = scmp.eq.s32.totalorder %s27, 1
      %p139 = scmp.ne.s32.totalorder %s134, %s136
      %p140 = scmp.eq.s32.totalorder %s27, 0
      %p141 = por %p139, %p140
      %p142 = scmp.ne.s32.totalorder %s134, %s136
      %p143 = scmp.eq.s32.totalorder %s32, 1
      %p144 = por %p142, %p143
      %p145 = scmp.ne.s32.totalorder %s136, %s137
      %p146 = scmp.eq.s32.totalorder %s32, 0
      %p147 = por %p145, %p146
      %p148 = scmp.ne.s32.totalorder %s136, %s137
      %p149 = scmp.eq.s32.totalorder %s33, 1
      %p150 = por %p148, %p149
      %p152 = scmp.ne.s32.totalorder %s137, %s151
      %p153 = scmp.eq.s32.totalorder %s33, 0
      %p154 = por %p152, %p153
      %s155 = ssub.s32 %s27, %s34
      %p156 = scmp.eq.s32.totalorder %s155, 0
      %s158 = sadd.s32 %s157, 1
      %s159 = scalar_select %p156, %s157, %s158
      %p162 = pneg %p156
      %p163 = scmp.eq.s32.totalorder %s27, 1
      %p164 = por %p162, %p163
      %p165 = scmp.ne.s32.totalorder %s157, %s160
      %p166 = scmp.eq.s32.totalorder %s27, 0
      %p167 = por %p165, %p166
      %p168 = scmp.ne.s32.totalorder %s157, %s160
      %p169 = scmp.eq.s32.totalorder %s32, 1
      %p170 = por %p168, %p169
      %p171 = scmp.ne.s32.totalorder %s160, %s161
      %p172 = scmp.eq.s32.totalorder %s32, 0
      %p173 = por %p171, %p172
      %p174 = scmp.ne.s32.totalorder %s160, %s161
      %p175 = scmp.eq.s32.totalorder %s33, 1
      %p176 = por %p174, %p175
      %p178 = scmp.ne.s32.totalorder %s161, %s177
      %p179 = scmp.eq.s32.totalorder %s33, 0
      %p180 = por %p178, %p179
      %s181 = ssub.s32 %s27, %s34
      %p182 = scmp.eq.s32.totalorder %s181, 0
      %s184 = sadd.s32 %s183, 1
      %s185 = scalar_select %p182, %s183, %s184
      %p188 = pneg %p182
      %p189 = scmp.eq.s32.totalorder %s27, 1
      %p190 = por %p188, %p189
      %p191 = scmp.ne.s32.totalorder %s183, %s186
      %p192 = scmp.eq.s32.totalorder %s27, 0
      %p193 = por %p191, %p192
      %p194 = scmp.ne.s32.totalorder %s183, %s186
      %p195 = scmp.eq.s32.totalorder %s32, 1
      %p196 = por %p194, %p195
      %p197 = scmp.ne.s32.totalorder %s186, %s187
      %p198 = scmp.eq.s32.totalorder %s32, 0
      %p199 = por %p197, %p198
      %p200 = scmp.ne.s32.totalorder %s186, %s187
      %p201 = scmp.eq.s32.totalorder %s33, 1
      %p202 = por %p200, %p201
      %p204 = scmp.ne.s32.totalorder %s187, %s203
      %p205 = scmp.eq.s32.totalorder %s33, 0
      %p206 = por %p204, %p205
      %s207 = ssub.s32 %s27, %s34
      %p208 = scmp.eq.s32.totalorder %s207, 0
      %s210 = sadd.s32 %s209, 1
      %s211 = scalar_select %p208, %s209, %s210
      %p214 = pneg %p208
      %p215 = scmp.eq.s32.totalorder %s27, 1
      %p216 = por %p214, %p215
      %p217 = scmp.ne.s32.totalorder %s209, %s212
      %p218 = scmp.eq.s32.totalorder %s27, 0
      %p219 = por %p217, %p218
      %p220 = scmp.ne.s32.totalorder %s209, %s212
      %p221 = scmp.eq.s32.totalorder %s32, 1
      %p222 = por %p220, %p221
      %p223 = scmp.ne.s32.totalorder %s212, %s213
      %p224 = scmp.eq.s32.totalorder %s32, 0
      %p225 = por %p223, %p224
      %p226 = scmp.ne.s32.totalorder %s212, %s213
      %p227 = scmp.eq.s32.totalorder %s33, 1
      %p228 = por %p226, %p227
      %p230 = scmp.ne.s32.totalorder %s213, %s229
      %p231 = scmp.eq.s32.totalorder %s33, 0
      %p232 = por %p230, %p231
      %p233 = scmp.le.s32.totalorder 1, %s27
      %p234 = scmp.lt.s32.totalorder %s27, 3
      %p235 = pnand %p233, %p234
      %p236 = pneg %p235
      // Predicated region
      $region9: #{tpu_custom_call.1} parent=5 // pred_check
        _
      $region10: #{tpu_custom_call.1} parent=5 // pred_check_branch
        %238 = sbr.rel (%p235) target = $region12
      $region11: #{tpu_custom_call.1} parent=5 // pred_region
        %s239 = ssub.s32 %s27, 1
        // Predicated region
        $region13: #{tpu_custom_call.1} parent=11 // pred_check
          %p240 = pneg %p126
        $region14: #{tpu_custom_call.1} parent=11 // pred_check_branch
          %242 = sbr.rel (%p240) target = $region16
        $region15: #{tpu_custom_call.1} parent=11 // pred_region
          %s244 = ssub.s32 512, 512
          %245 = vsyncadd [#allocation9], %s244
          %s246 = sshll.u32 [#allocation8], 4
          %s247 = int_to_ptr.vmem [resolvable:$true] %s246
          %252 = dma.hbm_to_vmem [thread:$0]  %s3, 512, %s247, [#allocation9], 128, 128, 8
        $region16: #{tpu_custom_call.1} parent=11 // pred_fallthru
          _
        // Predicated region
        $region17: #{tpu_custom_call.1} parent=11 // pred_check
          %p253 = pneg %p147
        $region18: #{tpu_custom_call.1} parent=11 // pred_check_branch
          %255 = sbr.rel (%p253) target = $region20
        $region19: #{tpu_custom_call.1} parent=11 // pred_region
          _
        $region20: #{tpu_custom_call.1} parent=11 // pred_fallthru
          _
      $region12: #{tpu_custom_call.1} parent=5 // pred_fallthru
        _
      %p256 = scmp.lt.s32.totalorder %s27, 2
      // Predicated region
      $region21: #{tpu_custom_call.1} parent=5 // pred_check
        %p257 = pneg %p256
      $region22: #{tpu_custom_call.1} parent=5 // pred_check_branch
        %259 = sbr.rel (%p257) target = $region24
      $region23: #{tpu_custom_call.1} parent=5 // pred_region
        // Predicated region
        $region25: #{tpu_custom_call.1} parent=23 // pred_check
          %p260 = pneg %p47
        $region26: #{tpu_custom_call.1} parent=23 // pred_check_branch
          %262 = sbr.rel (%p260) target = $region28
        $region27: #{tpu_custom_call.1} parent=23 // pred_region
          %s263 = sand.u32 %s37, 1
          %s264 = scalar_lea.sflag [#allocation3], %s263
          %s265 = sand.u32 %s37, 1
          %s266 = smul.addr %s265, 8
          %s267 = scalar_lea.vmem [#allocation2], %s266
          %s269 = ssub.s32 128, 128
          %270 = vsyncadd %s264, %s269
          %s271 = smul.addr %s27, 128
          %s272 = scalar_lea.hbm %s0, %s271
          %s274 = sshll.u32 %s267, 4
          %s275 = int_to_ptr.vmem [resolvable:$true] %s274
          %277 = dma.hbm_to_vmem [thread:$0]  %s272, 128, %s275, %s264
        $region28: #{tpu_custom_call.1} parent=23 // pred_fallthru
          _
        // Predicated region
        $region29: #{tpu_custom_call.1} parent=23 // pred_check
          %p278 = pneg %p73
        $region30: #{tpu_custom_call.1} parent=23 // pred_check_branch
          %280 = sbr.rel (%p278) target = $region32
        $region31: #{tpu_custom_call.1} parent=23 // pred_region
          %s281 = sand.u32 %s27, 1
          %s282 = scalar_lea.sflag [#allocation6], %s281
          %s283 = sand.u32 %s63, 1
          %s284 = smul.addr %s283, 64
          %s285 = scalar_lea.vmem [#allocation5], %s284
          %s286 = smul.u32 8, %s27
          %s288 = ssub.s32 1024, 1024
          %289 = vsyncadd %s282, %s288
          %s290 = smul.addr %s286, 128
          %s291 = scalar_lea.hbm %s1, %s290
          %s292 = sshll.u32 %s285, 4
          %s293 = int_to_ptr.vmem [resolvable:$true] %s292
          %298 = dma.hbm_to_vmem [thread:$0]  %s291, 1024, %s293, %s282, 128, 128, 8
        $region32: #{tpu_custom_call.1} parent=23 // pred_fallthru
          _
        // Predicated region
        $region33: #{tpu_custom_call.1} parent=23 // pred_check
          %p299 = pneg %p99
        $region34: #{tpu_custom_call.1} parent=23 // pred_check_branch
          %301 = sbr.rel (%p299) target = $region36
        $region35: #{tpu_custom_call.1} parent=23 // pred_region
          %s302 = sand.u32 %s27, 1
          %s303 = scalar_lea.sflag [#allocation6], %s302
          %s304 = sand.u32 %s89, 1
          %s305 = smul.addr %s304, 64
          %s306 = scalar_lea.vmem [#allocation7], %s305
          %s307 = smul.u32 8, %s27
          %s309 = ssub.s32 1024, 1024
          %310 = vsyncadd %s303, %s309
          %s311 = smul.addr %s307, 128
          %s312 = scalar_lea.hbm %s2, %s311
          %s313 = sshll.u32 %s306, 4
          %s314 = int_to_ptr.vmem [resolvable:$true] %s313
          %319 = dma.hbm_to_vmem [thread:$0]  %s312, 1024, %s314, %s303, 128, 128, 8
        $region36: #{tpu_custom_call.1} parent=23 // pred_fallthru
          _
      $region24: #{tpu_custom_call.1} parent=5 // pred_fallthru
        _
      %p320 = scmp.le.s32.totalorder 1, %s27
      %p321 = scmp.lt.s32.totalorder %s27, 3
      %p322 = pnand %p320, %p321
      %p323 = pneg %p322
      // Predicated region
      $region37: #{tpu_custom_call.1} parent=5 // pred_check
        _
      $region38: #{tpu_custom_call.1} parent=5 // pred_check_branch
        %325 = sbr.rel (%p322) target = $region40
      $region39: #{tpu_custom_call.1} parent=5 // pred_region
        %s326 = ssub.s32 %s27, 1
        %s327 = sand.u32 %s40, 1
        %s328 = scalar_lea.sflag [#allocation3], %s327
        %s329 = sand.u32 %s40, 1
        %s330 = smul.addr %s329, 8
        %s331 = scalar_lea.vmem [#allocation2], %s330
        // Predicated region
        $region41: #{tpu_custom_call.1} parent=39 // pred_check
          %p332 = pneg %p53
        $region42: #{tpu_custom_call.1} parent=39 // pred_check_branch
          %334 = sbr.rel (%p332) target = $region44
        $region43: #{tpu_custom_call.1} parent=39 // pred_region
          %335 = dma.done %s328, 128
        $region44: #{tpu_custom_call.1} parent=39 // pred_fallthru
          _
        %s336 = sand.u32 %s32, 1
        %s337 = scalar_lea.sflag [#allocation6], %s336
        %s338 = sand.u32 %s66, 1
        %s339 = smul.addr %s338, 64
        %s340 = scalar_lea.vmem [#allocation5], %s339
        // Predicated region
        $region45: #{tpu_custom_call.1} parent=39 // pred_check
          %p341 = pneg %p79
        $region46: #{tpu_custom_call.1} parent=39 // pred_check_branch
          %343 = sbr.rel (%p341) target = $region48
        $region47: #{tpu_custom_call.1} parent=39 // pred_region
          %344 = dma.done %s337, 1024
        $region48: #{tpu_custom_call.1} parent=39 // pred_fallthru
          _
        %s345 = sand.u32 %s32, 1
        %s346 = scalar_lea.sflag [#allocation6], %s345
        %s347 = sand.u32 %s92, 1
        %s348 = smul.addr %s347, 64
        %s349 = scalar_lea.vmem [#allocation7], %s348
        // Predicated region
        $region49: #{tpu_custom_call.1} parent=39 // pred_check
          %p350 = pneg %p105
        $region50: #{tpu_custom_call.1} parent=39 // pred_check_branch
          %352 = sbr.rel (%p350) target = $region52
        $region51: #{tpu_custom_call.1} parent=39 // pred_region
          %353 = dma.done %s346, 1024
        $region52: #{tpu_custom_call.1} parent=39 // pred_fallthru
          _
        // Predicated region
        $region53: #{tpu_custom_call.1} parent=39 // pred_check
          %p354 = pneg %p126
        $region54: #{tpu_custom_call.1} parent=39 // pred_check_branch
          %356 = sbr.rel (%p354) target = $region56
        $region55: #{tpu_custom_call.1} parent=39 // pred_region
          %357 = dma.done [#allocation9], 512
        $region56: #{tpu_custom_call.1} parent=39 // pred_fallthru
          _
        %s358 = sand.u32 %s40, 1
        %s359 = scalar_lea.sflag [#allocation3], %s358
        %s360 = sand.u32 %s40, 1
        %s361 = smul.addr %s360, 8
        %s362 = scalar_lea.vmem [#allocation2], %s361
        %p363 = pneg %p53
        %p364 = pneg %p50
        %s365 = sand.u32 %s32, 1
        %s366 = scalar_lea.sflag [#allocation6], %s365
        %s367 = sand.u32 %s66, 1
        %s368 = smul.addr %s367, 64
        %s369 = scalar_lea.vmem [#allocation5], %s368
        %p370 = pneg %p79
        %p371 = pneg %p76
        %s372 = sand.u32 %s32, 1
        %s373 = scalar_lea.sflag [#allocation6], %s372
        %s374 = sand.u32 %s92, 1
        %s375 = smul.addr %s374, 64
        %s376 = scalar_lea.vmem [#allocation7], %s375
        %p377 = pneg %p105
        %p378 = pneg %p102
        %p379 = pneg %p126
        %p380 = pneg %p123
        %p381 = pneg %p147
        %p382 = pneg %p144
        %p383 = pneg %p173
        %p384 = pneg %p170
        %s385 = sand.u32 %s160, 1
        %s386 = scalar_lea.sflag [#allocation4], %s385
        %s387 = sand.u32 %s160, 1
        %s388 = smul.addr %s387, 8
        %s389 = scalar_lea.vmem [#allocation10], %s388
        %p390 = pneg %p199
        %p391 = pneg %p196
        %s392 = sand.u32 %s32, 1
        %s393 = scalar_lea.sflag [#allocation12], %s392
        %s394 = sand.u32 %s186, 1
        %s395 = smul.addr %s394, 8
        %s396 = scalar_lea.vmem [#allocation11], %s395
        %p397 = pneg %p225
        %p398 = pneg %p222
        %s399 = sand.u32 %s32, 1
        %s400 = scalar_lea.sflag [#allocation12], %s399
        %s401 = sand.u32 %s212, 1
        %s402 = smul.addr %s401, 8
        %s403 = scalar_lea.vmem [#allocation13], %s402
        %s404 = smul.u32 8, %s32
        %s405 = smul.u32 8, %s32
        %v406 = vld [vmem:[#allocation8] sm:$0xff]
        %v407 = vld [vmem:[#allocation8 + $0x8] sm:$0xff]
        %v408 = vld [vmem:[#allocation8 + $0x10] sm:$0xff]
        %v409 = vld [vmem:[#allocation8 + $0x18] sm:$0xff]
        %v410 = vld [vmem:[%s4] sm:$0x1]
        %v411 = vld [vmem:[%s331] sm:$0xff]
        %v413 = vlaneseq
        %v414 = vshrl.u32 %v413, 7
        %v415 = vsub.s32 0, %v414
        %v416 = vrot.slane %v410, %v415
        %vm418 = vcmask 261120
        %v420 = vsel %vm418, %v411, 0
        %422 = vmatprep.subr.mxu0 0.0
        %423 = vmatpush1.msra.mxu0 0.0
        %424 = vmatprep.subr.mxu0 0.0
        %425 = vmatpush1.msra.mxu0 0.0
        %426 = vmatprep.subr.mxu0 0.0
        %427 = vmatpush1.msra.mxu0 0.0
        %428 = vmatprep.subr.mxu0 0.0
        %429 = vmatpush1.msra.mxu0 0.0
        %430 = vmatprep.subr.mxu0 0.0
        %431 = vmatpush1.msra.mxu0 0.0
        %432 = vmatprep.subr.mxu0 0.0
        %433 = vmatpush1.msra.mxu0 0.0
        %434 = vmatprep.subr.mxu0 0.0
        %435 = vmatpush1.msra.mxu0 0.0
        %436 = vmatprep.subr.mxu0 0.0
        %437 = vmatpush1.msra.mxu0 0.0
        %438 = vmatprep.subr.mxu0 0.0
        %439 = vmatpush1.msra.mxu0 0.0
        %440 = vmatprep.subr.mxu0 0.0
        %441 = vmatpush1.msra.mxu0 0.0
        %442 = vmatprep.subr.mxu0 0.0
        %443 = vmatpush1.msra.mxu0 0.0
        %444 = vmatprep.subr.mxu0 0.0
        %445 = vmatpush1.msra.mxu0 0.0
        %446 = vmatprep.subr.mxu0 0.0
        %447 = vmatpush1.msra.mxu0 %v409
        %448 = vmatprep.subr.mxu0 0.0
        %449 = vmatpush1.msra.mxu0 %v408
        %450 = vmatprep.subr.mxu0 0.0
        %451 = vmatpush1.msra.mxu0 %v407
        %452 = vmatprep.subr.mxu0 0.0
        %453 = vmatpush1.msra.mxu0 %v406
        %454 = vmatprep.subr.mxu0 0.0
        %455 = vmatpush2.msra.mxu0 0.0
        %456 = vmatprep.subr.mxu0 0.0
        %457 = vmatpush2.msra.mxu0 0.0
        %458 = vmatprep.subr.mxu0 0.0
        %459 = vmatpush2.msra.mxu0 0.0
        %460 = vmatprep.subr.mxu0 0.0
        %461 = vmatpush2.msra.mxu0 0.0
        %462 = vmatprep.subr.mxu0 0.0
        %463 = vmatpush2.msra.mxu0 0.0
        %464 = vmatprep.subr.mxu0 0.0
        %465 = vmatpush2.msra.mxu0 0.0
        %466 = vmatprep.subr.mxu0 0.0
        %467 = vmatpush2.msra.mxu0 0.0
        %468 = vmatprep.subr.mxu0 0.0
        %469 = vmatpush2.msra.mxu0 0.0
        %470 = vmatprep.subr.mxu0 0.0
        %471 = vmatpush2.msra.mxu0 0.0
        %472 = vmatprep.subr.mxu0 0.0
        %473 = vmatpush2.msra.mxu0 0.0
        %474 = vmatprep.subr.mxu0 0.0
        %475 = vmatpush2.msra.mxu0 0.0
        %476 = vmatprep.subr.mxu0 0.0
        %477 = vmatpush2.msra.mxu0 0.0
        %478 = vmatprep.subr.mxu0 0.0
        %479 = vmatpush2.msra.mxu0 0.0
        %480 = vmatprep.subr.mxu0 0.0
        %481 = vmatpush2.msra.mxu0 0.0
        %482 = vmatprep.subr.mxu0 0.0
        %483 = vmatpush2.msra.mxu0 0.0
        %484 = vmatprep.subr.mxu0 0.0
        %485 = vmatpush2.msra.mxu0 0.0
        %486 = vmatprep.mubr.f32.mxu0 0.0
        %487 = vmatmul.mubr.f32.gmra.mxu0 %v420
        %v488 = vpop.f32.mrf.mxu0
        %v489 = vadd.f32 %v416, %v488
        %v490 = vpop.f32.mrf.mxu0
        %491 = vdwg.mxu0
        %492 = vst [vmem:[%s389] sm:$0xff] %v489
        %v493 = vld [vmem:[%s340] sm:$0xff]
        %v494 = vld [vmem:[%s340 + $0x8] sm:$0xff]
        %v495 = vld [vmem:[%s340 + $0x10] sm:$0xff]
        %v496 = vld [vmem:[%s340 + $0x18] sm:$0xff]
        %v497 = vld [vmem:[%s340 + $0x20] sm:$0xff]
        %v498 = vld [vmem:[%s340 + $0x28] sm:$0xff]
        %v499 = vld [vmem:[%s340 + $0x30] sm:$0xff]
        %v500 = vld [vmem:[%s340 + $0x38] sm:$0xff]
        %v501 = vld [vmem:[%s349] sm:$0xff]
        %v502 = vld [vmem:[%s349 + $0x8] sm:$0xff]
        %v503 = vld [vmem:[%s349 + $0x10] sm:$0xff]
        %v504 = vld [vmem:[%s349 + $0x18] sm:$0xff]
        %v505 = vld [vmem:[%s349 + $0x20] sm:$0xff]
        %v506 = vld [vmem:[%s349 + $0x28] sm:$0xff]
        %v507 = vld [vmem:[%s349 + $0x30] sm:$0xff]
        %v508 = vld [vmem:[%s349 + $0x38] sm:$0xff]
        %v510 = vsel %vm418, %v493, 0
        %v513 = vsel %vm418, %v494, 0
        %v516 = vsel %vm418, %v495, 0
        %v519 = vsel %vm418, %v496, 0
        %v522 = vsel %vm418, %v497, 0
        %v525 = vsel %vm418, %v498, 0
        %v528 = vsel %vm418, %v499, 0
        %v531 = vsel %vm418, %v500, 0
        %v534 = vsel %vm418, %v501, 0
        %v537 = vsel %vm418, %v502, 0
        %v540 = vsel %vm418, %v503, 0
        %v543 = vsel %vm418, %v504, 0
        %v546 = vsel %vm418, %v505, 0
        %v549 = vsel %vm418, %v506, 0
        %v552 = vsel %vm418, %v507, 0
        %v555 = vsel %vm418, %v508, 0
        %557 = vmatprep.subr.mxu0 0.0
        %558 = vmatpush1.msra.mxu0 0.0
        %559 = vmatprep.subr.mxu0 0.0
        %560 = vmatpush1.msra.mxu0 0.0
        %561 = vmatprep.subr.mxu0 0.0
        %562 = vmatpush1.msra.mxu0 0.0
        %563 = vmatprep.subr.mxu0 0.0
        %564 = vmatpush1.msra.mxu0 0.0
        %565 = vmatprep.subr.mxu0 0.0
        %566 = vmatpush1.msra.mxu0 0.0
        %567 = vmatprep.subr.mxu0 0.0
        %568 = vmatpush1.msra.mxu0 0.0
        %569 = vmatprep.subr.mxu0 0.0
        %570 = vmatpush1.msra.mxu0 0.0
        %571 = vmatprep.subr.mxu0 0.0
        %572 = vmatpush1.msra.mxu0 0.0
        %573 = vmatprep.subr.mxu0 0.0
        %574 = vmatpush1.msra.mxu0 0.0
        %575 = vmatprep.subr.mxu0 0.0
        %576 = vmatpush1.msra.mxu0 0.0
        %577 = vmatprep.subr.mxu0 0.0
        %578 = vmatpush1.msra.mxu0 0.0
        %579 = vmatprep.subr.mxu0 0.0
        %580 = vmatpush1.msra.mxu0 0.0
        %581 = vmatprep.subr.mxu0 0.0
        %582 = vmatpush1.msra.mxu0 %v409
        %583 = vmatprep.subr.mxu0 0.0
        %584 = vmatpush1.msra.mxu0 %v408
        %585 = vmatprep.subr.mxu0 0.0
        %586 = vmatpush1.msra.mxu0 %v407
        %587 = vmatprep.subr.mxu0 0.0
        %588 = vmatpush1.msra.mxu0 %v406
        %589 = vmatprep.subr.mxu0 0.0
        %590 = vmatpush2.msra.mxu0 0.0
        %591 = vmatprep.subr.mxu0 0.0
        %592 = vmatpush2.msra.mxu0 0.0
        %593 = vmatprep.subr.mxu0 0.0
        %594 = vmatpush2.msra.mxu0 0.0
        %595 = vmatprep.subr.mxu0 0.0
        %596 = vmatpush2.msra.mxu0 0.0
        %597 = vmatprep.subr.mxu0 0.0
        %598 = vmatpush2.msra.mxu0 0.0
        %599 = vmatprep.subr.mxu0 0.0
        %600 = vmatpush2.msra.mxu0 0.0
        %601 = vmatprep.subr.mxu0 0.0
        %602 = vmatpush2.msra.mxu0 0.0
        %603 = vmatprep.subr.mxu0 0.0
        %604 = vmatpush2.msra.mxu0 0.0
        %605 = vmatprep.subr.mxu0 0.0
        %606 = vmatpush2.msra.mxu0 0.0
        %607 = vmatprep.subr.mxu0 0.0
        %608 = vmatpush2.msra.mxu0 0.0
        %609 = vmatprep.subr.mxu0 0.0
        %610 = vmatpush2.msra.mxu0 0.0
        %611 = vmatprep.subr.mxu0 0.0
        %612 = vmatpush2.msra.mxu0 0.0
        %613 = vmatprep.subr.mxu0 0.0
        %614 = vmatpush2.msra.mxu0 0.0
        %615 = vmatprep.subr.mxu0 0.0
        %616 = vmatpush2.msra.mxu0 0.0
        %617 = vmatprep.subr.mxu0 0.0
        %618 = vmatpush2.msra.mxu0 0.0
        %619 = vmatprep.subr.mxu0 0.0
        %620 = vmatpush2.msra.mxu0 0.0
        %621 = vmatprep.mubr.f32.mxu0 0.0
        %622 = vmatmul.mubr.f32.gmra.mxu0 %v510
        %v623 = vpop.f32.mrf.mxu0
        %v624 = vadd.f32 %v416, %v623
        %v625 = vpop.f32.mrf.mxu0
        %626 = vmatprep.mubr.f32.mxu0 0.0
        %627 = vmatmul.mubr.f32.gmra.mxu0 %v513
        %v628 = vpop.f32.mrf.mxu0
        %v629 = vadd.f32 %v416, %v628
        %v630 = vpop.f32.mrf.mxu0
        %631 = vmatprep.mubr.f32.mxu0 0.0
        %632 = vmatmul.mubr.f32.gmra.mxu0 %v516
        %v633 = vpop.f32.mrf.mxu0
        %v634 = vadd.f32 %v416, %v633
        %v635 = vpop.f32.mrf.mxu0
        %636 = vmatprep.mubr.f32.mxu0 0.0
        %637 = vmatmul.mubr.f32.gmra.mxu0 %v519
        %v638 = vpop.f32.mrf.mxu0
        %v639 = vadd.f32 %v416, %v638
        %v640 = vpop.f32.mrf.mxu0
        %641 = vmatprep.mubr.f32.mxu0 0.0
        %642 = vmatmul.mubr.f32.gmra.mxu0 %v522
        %v643 = vpop.f32.mrf.mxu0
        %v644 = vadd.f32 %v416, %v643
        %v645 = vpop.f32.mrf.mxu0
        %646 = vmatprep.mubr.f32.mxu0 0.0
        %647 = vmatmul.mubr.f32.gmra.mxu0 %v525
        %v648 = vpop.f32.mrf.mxu0
        %v649 = vadd.f32 %v416, %v648
        %v650 = vpop.f32.mrf.mxu0
        %651 = vmatprep.mubr.f32.mxu0 0.0
        %652 = vmatmul.mubr.f32.gmra.mxu0 %v528
        %v653 = vpop.f32.mrf.mxu0
        %v654 = vadd.f32 %v416, %v653
        %v655 = vpop.f32.mrf.mxu0
        %656 = vmatprep.mubr.f32.mxu0 0.0
        %657 = vmatmul.mubr.f32.gmra.mxu0 %v531
        %v658 = vpop.f32.mrf.mxu0
        %v659 = vadd.f32 %v416, %v658
        %v660 = vpop.f32.mrf.mxu0
        %661 = vmatprep.mubr.f32.mxu0 0.0
        %662 = vmatmul.mubr.f32.gmra.mxu0 %v534
        %v663 = vpop.f32.mrf.mxu0
        %v664 = vadd.f32 %v416, %v663
        %v665 = vpop.f32.mrf.mxu0
        %666 = vmatprep.mubr.f32.mxu0 0.0
        %667 = vmatmul.mubr.f32.gmra.mxu0 %v537
        %v668 = vpop.f32.mrf.mxu0
        %v669 = vadd.f32 %v416, %v668
        %v670 = vpop.f32.mrf.mxu0
        %671 = vmatprep.mubr.f32.mxu0 0.0
        %672 = vmatmul.mubr.f32.gmra.mxu0 %v540
        %v673 = vpop.f32.mrf.mxu0
        %v674 = vadd.f32 %v416, %v673
        %v675 = vpop.f32.mrf.mxu0
        %676 = vmatprep.mubr.f32.mxu0 0.0
        %677 = vmatmul.mubr.f32.gmra.mxu0 %v543
        %v678 = vpop.f32.mrf.mxu0
        %v679 = vadd.f32 %v416, %v678
        %v680 = vpop.f32.mrf.mxu0
        %681 = vmatprep.mubr.f32.mxu0 0.0
        %682 = vmatmul.mubr.f32.gmra.mxu0 %v546
        %v683 = vpop.f32.mrf.mxu0
        %v684 = vadd.f32 %v416, %v683
        %v685 = vpop.f32.mrf.mxu0
        %686 = vmatprep.mubr.f32.mxu0 0.0
        %687 = vmatmul.mubr.f32.gmra.mxu0 %v549
        %v688 = vpop.f32.mrf.mxu0
        %v689 = vadd.f32 %v416, %v688
        %v690 = vpop.f32.mrf.mxu0
        %691 = vmatprep.mubr.f32.mxu0 0.0
        %692 = vmatmul.mubr.f32.gmra.mxu0 %v552
        %v693 = vpop.f32.mrf.mxu0
        %v694 = vadd.f32 %v416, %v693
        %v695 = vpop.f32.mrf.mxu0
        %696 = vmatprep.mubr.f32.mxu0 0.0
        %697 = vmatmul.mubr.f32.gmra.mxu0 %v555
        %v698 = vpop.f32.mrf.mxu0
        %v699 = vadd.f32 %v416, %v698
        %v700 = vpop.f32.mrf.mxu0
        %701 = vdwg.mxu0
        %v703 = vcombine.high %v489, %v489
        %v705 = vunpack.c.l.s4 1966171168
        %v706 = vunpack.c.0.s8 %v705
        %v707 = vlaneseq
        %v708 = vshrl.u32 %v707, 7
        %v709 = vsub.s32 %v706, %v708
        %v710 = vrot.slane %v489, %v709
        %v712 = vunpack.c.l.s4 1966171168
        %v713 = vunpack.c.0.s8 %v712
        %v714 = vlaneseq
        %v715 = vshrl.u32 %v714, 7
        %v716 = vsub.s32 %v713, %v715
        %v717 = vrot.slane %v703, %v716
        %v718 = vcombine.high %v710, %v710
        %v719 = vcombine.high %v717, %v717
        %v721 = vunpack.c.l.s4 1966171168
        %v722 = vunpack.c.0.s8 %v721
        %v723 = vlaneseq
        %v724 = vshrl.u32 %v723, 7
        %v725 = vsub.s32 %v722, %v724
        %v726 = vrot.slane %v710, %v725
        %v728 = vunpack.c.l.s4 1966171168
        %v729 = vunpack.c.0.s8 %v728
        %v730 = vlaneseq
        %v731 = vshrl.u32 %v730, 7
        %v732 = vsub.s32 %v729, %v731
        %v733 = vrot.slane %v717, %v732
        %v735 = vunpack.c.l.s4 1966171168
        %v736 = vunpack.c.0.s8 %v735
        %v737 = vlaneseq
        %v738 = vshrl.u32 %v737, 7
        %v739 = vsub.s32 %v736, %v738
        %v740 = vrot.slane %v718, %v739
        %v742 = vunpack.c.l.s4 1966171168
        %v743 = vunpack.c.0.s8 %v742
        %v744 = vlaneseq
        %v745 = vshrl.u32 %v744, 7
        %v746 = vsub.s32 %v743, %v745
        %v747 = vrot.slane %v719, %v746
        %v748 = vcombine.high %v726, %v726
        %v749 = vcombine.high %v733, %v733
        %v750 = vcombine.high %v740, %v740
        %v751 = vcombine.high %v747, %v747
        %v752 = vlaneseq
        %v753 = vshrl.u32 %v752, 7
        %v754 = vsub.s32 0, %v753
        %v755 = vrot.slane %v726, %v754
        %v756 = vlaneseq
        %v757 = vshrl.u32 %v756, 7
        %v758 = vsub.s32 0, %v757
        %v759 = vrot.slane %v740, %v758
        %v760 = vlaneseq
        %v761 = vshrl.u32 %v760, 7
        %v762 = vsub.s32 0, %v761
        %v763 = vrot.slane %v748, %v762
        %v764 = vlaneseq
        %v765 = vshrl.u32 %v764, 7
        %v766 = vsub.s32 0, %v765
        %v767 = vrot.slane %v750, %v766
        %v768 = vlaneseq
        %v769 = vshrl.u32 %v768, 7
        %v770 = vsub.s32 0, %v769
        %v771 = vrot.slane %v733, %v770
        %v772 = vlaneseq
        %v773 = vshrl.u32 %v772, 7
        %v774 = vsub.s32 0, %v773
        %v775 = vrot.slane %v747, %v774
        %v776 = vlaneseq
        %v777 = vshrl.u32 %v776, 7
        %v778 = vsub.s32 0, %v777
        %v779 = vrot.slane %v749, %v778
        %v780 = vlaneseq
        %v781 = vshrl.u32 %v780, 7
        %v782 = vsub.s32 0, %v781
        %v783 = vrot.slane %v751, %v782
        %v792 = vmul.f32 %v755, %v624
        %v793 = vmul.f32 %v759, %v629
        %v794 = vmul.f32 %v763, %v634
        %v795 = vmul.f32 %v767, %v639
        %v796 = vmul.f32 %v771, %v644
        %v797 = vmul.f32 %v775, %v649
        %v798 = vmul.f32 %v779, %v654
        %v799 = vmul.f32 %v783, %v659
        %800 = vadd.xlane.f32.xlu0 %v792
        %v801 = vpop.xlane.xlu0 %800
        %802 = vadd.xlane.f32.xlu0 %v793
        %v803 = vpop.xlane.xlu0 %802
        %804 = vadd.xlane.f32.xlu0 %v794
        %v805 = vpop.xlane.xlu0 %804
        %806 = vadd.xlane.f32.xlu0 %v795
        %v807 = vpop.xlane.xlu0 %806
        %808 = vadd.xlane.f32.xlu0 %v796
        %v809 = vpop.xlane.xlu0 %808
        %810 = vadd.xlane.f32.xlu0 %v797
        %v811 = vpop.xlane.xlu0 %810
        %812 = vadd.xlane.f32.xlu0 %v798
        %v813 = vpop.xlane.xlu0 %812
        %814 = vadd.xlane.f32.xlu0 %v799
        %v815 = vpop.xlane.xlu0 %814
        %v824 = vlaneseq
        %v825 = vand.u32 %v824, 127
        %v826 = vlaneseq
        %v827 = vshrl.u32 %v826, 7
        %v828 = vsub.s32 %v825, %v827
        %v829 = vrot.slane %v801, %v828
        %v830 = vlaneseq
        %v831 = vshrl.u32 %v830, 7
        %v832 = vsub.s32 %v825, %v831
        %v833 = vrot.slane %v803, %v832
        %v834 = vlaneseq
        %v835 = vshrl.u32 %v834, 7
        %v836 = vsub.s32 %v825, %v835
        %v837 = vrot.slane %v805, %v836
        %v838 = vlaneseq
        %v839 = vshrl.u32 %v838, 7
        %v840 = vsub.s32 %v825, %v839
        %v841 = vrot.slane %v807, %v840
        %v842 = vlaneseq
        %v843 = vshrl.u32 %v842, 7
        %v844 = vsub.s32 %v825, %v843
        %v845 = vrot.slane %v809, %v844
        %v846 = vlaneseq
        %v847 = vshrl.u32 %v846, 7
        %v848 = vsub.s32 %v825, %v847
        %v849 = vrot.slane %v811, %v848
        %v850 = vlaneseq
        %v851 = vshrl.u32 %v850, 7
        %v852 = vsub.s32 %v825, %v851
        %v853 = vrot.slane %v813, %v852
        %v854 = vlaneseq
        %v855 = vshrl.u32 %v854, 7
        %v856 = vsub.s32 %v825, %v855
        %v857 = vrot.slane %v815, %v856
        %vm858 = vcmask 1041409
        %v859 = vsel %vm858, %v833, %v829
        %vm860 = vcmask 1042434
        %v861 = vsel %vm860, %v837, %v859
        %vm862 = vcmask 1043459
        %v863 = vsel %vm862, %v841, %v861
        %vm864 = vcmask 1044484
        %v865 = vsel %vm864, %v845, %v863
        %vm866 = vcmask 1045509
        %v867 = vsel %vm866, %v849, %v865
        %vm868 = vcmask 1046534
        %v869 = vsel %vm868, %v853, %v867
        %vm870 = vcmask 1047559
        %v871 = vsel %vm870, %v857, %v869
        %vm873 = vcmask 64512
        %v874 = vsel %vm873, %v871, -inf
        %875 = vmax.xlane.f32.xlu0 %v874
        %v876 = vpop.xlane.xlu0 %875
        %v878 = vlaneseq
        %v879 = vshrl.u32 %v878, 7
        %v880 = vsub.s32 0, %v879
        %v881 = vrot.slane %v876, %v880
        %v882 = vlaneseq
        %v883 = vshrl.u32 %v882, 7
        %v884 = vsub.s32 1, %v883
        %v885 = vrot.slane %v876, %v884
        %v886 = vlaneseq
        %v887 = vshrl.u32 %v886, 7
        %v888 = vsub.s32 2, %v887
        %v889 = vrot.slane %v876, %v888
        %v890 = vlaneseq
        %v891 = vshrl.u32 %v890, 7
        %v892 = vsub.s32 3, %v891
        %v893 = vrot.slane %v876, %v892
        %v894 = vlaneseq
        %v895 = vshrl.u32 %v894, 7
        %v896 = vsub.s32 4, %v895
        %v897 = vrot.slane %v876, %v896
        %v898 = vlaneseq
        %v899 = vshrl.u32 %v898, 7
        %v900 = vsub.s32 5, %v899
        %v901 = vrot.slane %v876, %v900
        %v902 = vlaneseq
        %v903 = vshrl.u32 %v902, 7
        %v904 = vsub.s32 6, %v903
        %v905 = vrot.slane %v876, %v904
        %v906 = vlaneseq
        %v907 = vshrl.u32 %v906, 7
        %v908 = vsub.s32 7, %v907
        %v909 = vrot.slane %v876, %v908
        %v918 = vsub.f32 %v801, %v881
        %v919 = vsub.f32 %v803, %v885
        %v920 = vsub.f32 %v805, %v889
        %v921 = vsub.f32 %v807, %v893
        %v922 = vsub.f32 %v809, %v897
        %v923 = vsub.f32 %v811, %v901
        %v924 = vsub.f32 %v813, %v905
        %v925 = vsub.f32 %v815, %v909
        %v926 = vmul.f32 %v918, 1.442695
        %v927 = vpow.pop %v926
        %v928 = vmul.f32 %v919, 1.442695
        %v929 = vpow.pop %v928
        %v930 = vmul.f32 %v920, 1.442695
        %v931 = vpow.pop %v930
        %v932 = vmul.f32 %v921, 1.442695
        %v933 = vpow.pop %v932
        %v934 = vmul.f32 %v922, 1.442695
        %v935 = vpow.pop %v934
        %v936 = vmul.f32 %v923, 1.442695
        %v937 = vpow.pop %v936
        %v938 = vmul.f32 %v924, 1.442695
        %v939 = vpow.pop %v938
        %v940 = vmul.f32 %v925, 1.442695
        %v941 = vpow.pop %v940
        %950 = vset.pattern.permute.xlu0 0
        %951 = vperm.xlu0 %950, %v927
        %v952 = vpop.permute.xlu0 %951
        %953 = vset.pattern.permute.xlu0 0
        %954 = vperm.xlu0 %953, %v929
        %v955 = vpop.permute.xlu0 %954
        %956 = vset.pattern.permute.xlu0 0
        %957 = vperm.xlu0 %956, %v931
        %v958 = vpop.permute.xlu0 %957
        %959 = vset.pattern.permute.xlu0 0
        %960 = vperm.xlu0 %959, %v933
        %v961 = vpop.permute.xlu0 %960
        %962 = vset.pattern.permute.xlu0 0
        %963 = vperm.xlu0 %962, %v935
        %v964 = vpop.permute.xlu0 %963
        %965 = vset.pattern.permute.xlu0 0
        %966 = vperm.xlu0 %965, %v937
        %v967 = vpop.permute.xlu0 %966
        %968 = vset.pattern.permute.xlu0 0
        %969 = vperm.xlu0 %968, %v939
        %v970 = vpop.permute.xlu0 %969
        %971 = vset.pattern.permute.xlu0 0
        %972 = vperm.xlu0 %971, %v941
        %v973 = vpop.permute.xlu0 %972
        %v974 = vlaneseq
        %v975 = vshrl.u32 %v974, 7
        %v976 = vsub.s32 %v825, %v975
        %v977 = vrot.slane %v952, %v976
        %v978 = vlaneseq
        %v979 = vshrl.u32 %v978, 7
        %v980 = vsub.s32 %v825, %v979
        %v981 = vrot.slane %v955, %v980
        %v982 = vlaneseq
        %v983 = vshrl.u32 %v982, 7
        %v984 = vsub.s32 %v825, %v983
        %v985 = vrot.slane %v958, %v984
        %v986 = vlaneseq
        %v987 = vshrl.u32 %v986, 7
        %v988 = vsub.s32 %v825, %v987
        %v989 = vrot.slane %v961, %v988
        %v990 = vlaneseq
        %v991 = vshrl.u32 %v990, 7
        %v992 = vsub.s32 %v825, %v991
        %v993 = vrot.slane %v964, %v992
        %v994 = vlaneseq
        %v995 = vshrl.u32 %v994, 7
        %v996 = vsub.s32 %v825, %v995
        %v997 = vrot.slane %v967, %v996
        %v998 = vlaneseq
        %v999 = vshrl.u32 %v998, 7
        %v1000 = vsub.s32 %v825, %v999
        %v1001 = vrot.slane %v970, %v1000
        %v1002 = vlaneseq
        %v1003 = vshrl.u32 %v1002, 7
        %v1004 = vsub.s32 %v825, %v1003
        %v1005 = vrot.slane %v973, %v1004
        %v1006 = vsel %vm858, %v981, %v977
        %v1007 = vsel %vm860, %v985, %v1006
        %v1008 = vsel %vm862, %v989, %v1007
        %v1009 = vsel %vm864, %v993, %v1008
        %v1010 = vsel %vm866, %v997, %v1009
        %v1011 = vsel %vm868, %v1001, %v1010
        %v1012 = vsel %vm870, %v1005, %v1011
        %v1014 = vsel %vm873, %v1012, 0.0
        %1015 = vadd.xlane.f32.xlu0 %v1014
        %v1016 = vpop.xlane.xlu0 %1015
        %v1017 = vrcp.pop %v1016
        %v1019 = vlaneseq
        %v1020 = vshrl.u32 %v1019, 7
        %v1021 = vsub.s32 0, %v1020
        %v1022 = vrot.slane %v1017, %v1021
        %v1023 = vlaneseq
        %v1024 = vshrl.u32 %v1023, 7
        %v1025 = vsub.s32 1, %v1024
        %v1026 = vrot.slane %v1017, %v1025
        %v1027 = vlaneseq
        %v1028 = vshrl.u32 %v1027, 7
        %v1029 = vsub.s32 2, %v1028
        %v1030 = vrot.slane %v1017, %v1029
        %v1031 = vlaneseq
        %v1032 = vshrl.u32 %v1031, 7
        %v1033 = vsub.s32 3, %v1032
        %v1034 = vrot.slane %v1017, %v1033
        %v1035 = vlaneseq
        %v1036 = vshrl.u32 %v1035, 7
        %v1037 = vsub.s32 4, %v1036
        %v1038 = vrot.slane %v1017, %v1037
        %v1039 = vlaneseq
        %v1040 = vshrl.u32 %v1039, 7
        %v1041 = vsub.s32 5, %v1040
        %v1042 = vrot.slane %v1017, %v1041
        %v1043 = vlaneseq
        %v1044 = vshrl.u32 %v1043, 7
        %v1045 = vsub.s32 6, %v1044
        %v1046 = vrot.slane %v1017, %v1045
        %v1047 = vlaneseq
        %v1048 = vshrl.u32 %v1047, 7
        %v1049 = vsub.s32 7, %v1048
        %v1050 = vrot.slane %v1017, %v1049
        %v1059 = vmul.f32 %v927, %v1022
        %v1060 = vmul.f32 %v929, %v1026
        %v1061 = vmul.f32 %v931, %v1030
        %v1062 = vmul.f32 %v933, %v1034
        %v1063 = vmul.f32 %v935, %v1038
        %v1064 = vmul.f32 %v937, %v1042
        %v1065 = vmul.f32 %v939, %v1046
        %v1066 = vmul.f32 %v941, %v1050
        %1068 = vset.pattern.permute.xlu0 0
        %1069 = vperm.xlu0 %1068, %v1059
        %v1070 = vpop.permute.xlu0 %1069
        %1073 = vset.pattern.permute.xlu0 0
        %1074 = vperm.xlu0 %1073, %v1060
        %v1075 = vpop.permute.xlu0 %1074
        %1078 = vset.pattern.permute.xlu0 0
        %1079 = vperm.xlu0 %1078, %v1061
        %v1080 = vpop.permute.xlu0 %1079
        %1083 = vset.pattern.permute.xlu0 0
        %1084 = vperm.xlu0 %1083, %v1062
        %v1085 = vpop.permute.xlu0 %1084
        %1088 = vset.pattern.permute.xlu0 0
        %1089 = vperm.xlu0 %1088, %v1063
        %v1090 = vpop.permute.xlu0 %1089
        %1093 = vset.pattern.permute.xlu0 0
        %1094 = vperm.xlu0 %1093, %v1064
        %v1095 = vpop.permute.xlu0 %1094
        %1098 = vset.pattern.permute.xlu0 0
        %1099 = vperm.xlu0 %1098, %v1065
        %v1100 = vpop.permute.xlu0 %1099
        %1103 = vset.pattern.permute.xlu0 0
        %1104 = vperm.xlu0 %1103, %v1066
        %v1105 = vpop.permute.xlu0 %1104
        %v1107 = vmul.f32 %v624, %v1070
        %v1108 = vmul.f32 %v629, %v1075
        %v1109 = vmul.f32 %v634, %v1080
        %v1110 = vmul.f32 %v639, %v1085
        %v1111 = vmul.f32 %v644, %v1090
        %v1112 = vmul.f32 %v649, %v1095
        %v1113 = vmul.f32 %v654, %v1100
        %v1114 = vmul.f32 %v659, %v1105
        %v1115 = vrot.slane %v1107, 4
        %v1116 = vadd.f32 %v1107, %v1115
        %v1117 = vrot.slane %v1116, 2
        %v1118 = vadd.f32 %v1116, %v1117
        %v1119 = vrot.slane %v1118, 1
        %v1120 = vadd.f32 %v1118, %v1119
        %v1121 = vrot.slane %v1108, 4
        %v1122 = vadd.f32 %v1108, %v1121
        %v1123 = vrot.slane %v1122, 2
        %v1124 = vadd.f32 %v1122, %v1123
        %v1125 = vrot.slane %v1124, 1
        %v1126 = vadd.f32 %v1124, %v1125
        %v1127 = vrot.slane %v1109, 4
        %v1128 = vadd.f32 %v1109, %v1127
        %v1129 = vrot.slane %v1128, 2
        %v1130 = vadd.f32 %v1128, %v1129
        %v1131 = vrot.slane %v1130, 1
        %v1132 = vadd.f32 %v1130, %v1131
        %v1133 = vrot.slane %v1110, 4
        %v1134 = vadd.f32 %v1110, %v1133
        %v1135 = vrot.slane %v1134, 2
        %v1136 = vadd.f32 %v1134, %v1135
        %v1137 = vrot.slane %v1136, 1
        %v1138 = vadd.f32 %v1136, %v1137
        %v1139 = vrot.slane %v1111, 4
        %v1140 = vadd.f32 %v1111, %v1139
        %v1141 = vrot.slane %v1140, 2
        %v1142 = vadd.f32 %v1140, %v1141
        %v1143 = vrot.slane %v1142, 1
        %v1144 = vadd.f32 %v1142, %v1143
        %v1145 = vrot.slane %v1112, 4
        %v1146 = vadd.f32 %v1112, %v1145
        %v1147 = vrot.slane %v1146, 2
        %v1148 = vadd.f32 %v1146, %v1147
        %v1149 = vrot.slane %v1148, 1
        %v1150 = vadd.f32 %v1148, %v1149
        %v1151 = vrot.slane %v1113, 4
        %v1152 = vadd.f32 %v1113, %v1151
        %v1153 = vrot.slane %v1152, 2
        %v1154 = vadd.f32 %v1152, %v1153
        %v1155 = vrot.slane %v1154, 1
        %v1156 = vadd.f32 %v1154, %v1155
        %v1157 = vrot.slane %v1114, 4
        %v1158 = vadd.f32 %v1114, %v1157
        %v1159 = vrot.slane %v1158, 2
        %v1160 = vadd.f32 %v1158, %v1159
        %v1161 = vrot.slane %v1160, 1
        %v1162 = vadd.f32 %v1160, %v1161
        %v1171 = vsel %vm858, %v1126, %v1120
        %v1172 = vsel %vm860, %v1132, %v1171
        %v1173 = vsel %vm862, %v1138, %v1172
        %v1174 = vsel %vm864, %v1144, %v1173
        %v1175 = vsel %vm866, %v1150, %v1174
        %v1176 = vsel %vm868, %v1156, %v1175
        %v1177 = vsel %vm870, %v1162, %v1176
        %1179 = vst [vmem:[%s396] sm:$0xff] %v1177
        %v1180 = vmul.f32 %v755, %v664
        %v1181 = vmul.f32 %v759, %v669
        %v1182 = vmul.f32 %v763, %v674
        %v1183 = vmul.f32 %v767, %v679
        %v1184 = vmul.f32 %v771, %v684
        %v1185 = vmul.f32 %v775, %v689
        %v1186 = vmul.f32 %v779, %v694
        %v1187 = vmul.f32 %v783, %v699
        %1188 = vadd.xlane.f32.xlu0 %v1180
        %v1189 = vpop.xlane.xlu0 %1188
        %1190 = vadd.xlane.f32.xlu0 %v1181
        %v1191 = vpop.xlane.xlu0 %1190
        %1192 = vadd.xlane.f32.xlu0 %v1182
        %v1193 = vpop.xlane.xlu0 %1192
        %1194 = vadd.xlane.f32.xlu0 %v1183
        %v1195 = vpop.xlane.xlu0 %1194
        %1196 = vadd.xlane.f32.xlu0 %v1184
        %v1197 = vpop.xlane.xlu0 %1196
        %1198 = vadd.xlane.f32.xlu0 %v1185
        %v1199 = vpop.xlane.xlu0 %1198
        %1200 = vadd.xlane.f32.xlu0 %v1186
        %v1201 = vpop.xlane.xlu0 %1200
        %1202 = vadd.xlane.f32.xlu0 %v1187
        %v1203 = vpop.xlane.xlu0 %1202
        %v1212 = vlaneseq
        %v1213 = vshrl.u32 %v1212, 7
        %v1214 = vsub.s32 %v825, %v1213
        %v1215 = vrot.slane %v1189, %v1214
        %v1216 = vlaneseq
        %v1217 = vshrl.u32 %v1216, 7
        %v1218 = vsub.s32 %v825, %v1217
        %v1219 = vrot.slane %v1191, %v1218
        %v1220 = vlaneseq
        %v1221 = vshrl.u32 %v1220, 7
        %v1222 = vsub.s32 %v825, %v1221
        %v1223 = vrot.slane %v1193, %v1222
        %v1224 = vlaneseq
        %v1225 = vshrl.u32 %v1224, 7
        %v1226 = vsub.s32 %v825, %v1225
        %v1227 = vrot.slane %v1195, %v1226
        %v1228 = vlaneseq
        %v1229 = vshrl.u32 %v1228, 7
        %v1230 = vsub.s32 %v825, %v1229
        %v1231 = vrot.slane %v1197, %v1230
        %v1232 = vlaneseq
        %v1233 = vshrl.u32 %v1232, 7
        %v1234 = vsub.s32 %v825, %v1233
        %v1235 = vrot.slane %v1199, %v1234
        %v1236 = vlaneseq
        %v1237 = vshrl.u32 %v1236, 7
        %v1238 = vsub.s32 %v825, %v1237
        %v1239 = vrot.slane %v1201, %v1238
        %v1240 = vlaneseq
        %v1241 = vshrl.u32 %v1240, 7
        %v1242 = vsub.s32 %v825, %v1241
        %v1243 = vrot.slane %v1203, %v1242
        %v1244 = vsel %vm858, %v1219, %v1215
        %v1245 = vsel %vm860, %v1223, %v1244
        %v1246 = vsel %vm862, %v1227, %v1245
        %v1247 = vsel %vm864, %v1231, %v1246
        %v1248 = vsel %vm866, %v1235, %v1247
        %v1249 = vsel %vm868, %v1239, %v1248
        %v1250 = vsel %vm870, %v1243, %v1249
        %v1252 = vsel %vm873, %v1250, -inf
        %1253 = vmax.xlane.f32.xlu0 %v1252
        %v1254 = vpop.xlane.xlu0 %1253
        %v1256 = vlaneseq
        %v1257 = vshrl.u32 %v1256, 7
        %v1258 = vsub.s32 0, %v1257
        %v1259 = vrot.slane %v1254, %v1258
        %v1260 = vlaneseq
        %v1261 = vshrl.u32 %v1260, 7
        %v1262 = vsub.s32 1, %v1261
        %v1263 = vrot.slane %v1254, %v1262
        %v1264 = vlaneseq
        %v1265 = vshrl.u32 %v1264, 7
        %v1266 = vsub.s32 2, %v1265
        %v1267 = vrot.slane %v1254, %v1266
        %v1268 = vlaneseq
        %v1269 = vshrl.u32 %v1268, 7
        %v1270 = vsub.s32 3, %v1269
        %v1271 = vrot.slane %v1254, %v1270
        %v1272 = vlaneseq
        %v1273 = vshrl.u32 %v1272, 7
        %v1274 = vsub.s32 4, %v1273
        %v1275 = vrot.slane %v1254, %v1274
        %v1276 = vlaneseq
        %v1277 = vshrl.u32 %v1276, 7
        %v1278 = vsub.s32 5, %v1277
        %v1279 = vrot.slane %v1254, %v1278
        %v1280 = vlaneseq
        %v1281 = vshrl.u32 %v1280, 7
        %v1282 = vsub.s32 6, %v1281
        %v1283 = vrot.slane %v1254, %v1282
        %v1284 = vlaneseq
        %v1285 = vshrl.u32 %v1284, 7
        %v1286 = vsub.s32 7, %v1285
        %v1287 = vrot.slane %v1254, %v1286
        %v1296 = vsub.f32 %v1189, %v1259
        %v1297 = vsub.f32 %v1191, %v1263
        %v1298 = vsub.f32 %v1193, %v1267
        %v1299 = vsub.f32 %v1195, %v1271
        %v1300 = vsub.f32 %v1197, %v1275
        %v1301 = vsub.f32 %v1199, %v1279
        %v1302 = vsub.f32 %v1201, %v1283
        %v1303 = vsub.f32 %v1203, %v1287
        %v1304 = vmul.f32 %v1296, 1.442695
        %v1305 = vpow.pop %v1304
        %v1306 = vmul.f32 %v1297, 1.442695
        %v1307 = vpow.pop %v1306
        %v1308 = vmul.f32 %v1298, 1.442695
        %v1309 = vpow.pop %v1308
        %v1310 = vmul.f32 %v1299, 1.442695
        %v1311 = vpow.pop %v1310
        %v1312 = vmul.f32 %v1300, 1.442695
        %v1313 = vpow.pop %v1312
        %v1314 = vmul.f32 %v1301, 1.442695
        %v1315 = vpow.pop %v1314
        %v1316 = vmul.f32 %v1302, 1.442695
        %v1317 = vpow.pop %v1316
        %v1318 = vmul.f32 %v1303, 1.442695
        %v1319 = vpow.pop %v1318
        %1328 = vset.pattern.permute.xlu0 0
        %1329 = vperm.xlu0 %1328, %v1305
        %v1330 = vpop.permute.xlu0 %1329
        %1331 = vset.pattern.permute.xlu0 0
        %1332 = vperm.xlu0 %1331, %v1307
        %v1333 = vpop.permute.xlu0 %1332
        %1334 = vset.pattern.permute.xlu0 0
        %1335 = vperm.xlu0 %1334, %v1309
        %v1336 = vpop.permute.xlu0 %1335
        %1337 = vset.pattern.permute.xlu0 0
        %1338 = vperm.xlu0 %1337, %v1311
        %v1339 = vpop.permute.xlu0 %1338
        %1340 = vset.pattern.permute.xlu0 0
        %1341 = vperm.xlu0 %1340, %v1313
        %v1342 = vpop.permute.xlu0 %1341
        %1343 = vset.pattern.permute.xlu0 0
        %1344 = vperm.xlu0 %1343, %v1315
        %v1345 = vpop.permute.xlu0 %1344
        %1346 = vset.pattern.permute.xlu0 0
        %1347 = vperm.xlu0 %1346, %v1317
        %v1348 = vpop.permute.xlu0 %1347
        %1349 = vset.pattern.permute.xlu0 0
        %1350 = vperm.xlu0 %1349, %v1319
        %v1351 = vpop.permute.xlu0 %1350
        %v1352 = vlaneseq
        %v1353 = vshrl.u32 %v1352, 7
        %v1354 = vsub.s32 %v825, %v1353
        %v1355 = vrot.slane %v1330, %v1354
        %v1356 = vlaneseq
        %v1357 = vshrl.u32 %v1356, 7
        %v1358 = vsub.s32 %v825, %v1357
        %v1359 = vrot.slane %v1333, %v1358
        %v1360 = vlaneseq
        %v1361 = vshrl.u32 %v1360, 7
        %v1362 = vsub.s32 %v825, %v1361
        %v1363 = vrot.slane %v1336, %v1362
        %v1364 = vlaneseq
        %v1365 = vshrl.u32 %v1364, 7
        %v1366 = vsub.s32 %v825, %v1365
        %v1367 = vrot.slane %v1339, %v1366
        %v1368 = vlaneseq
        %v1369 = vshrl.u32 %v1368, 7
        %v1370 = vsub.s32 %v825, %v1369
        %v1371 = vrot.slane %v1342, %v1370
        %v1372 = vlaneseq
        %v1373 = vshrl.u32 %v1372, 7
        %v1374 = vsub.s32 %v825, %v1373
        %v1375 = vrot.slane %v1345, %v1374
        %v1376 = vlaneseq
        %v1377 = vshrl.u32 %v1376, 7
        %v1378 = vsub.s32 %v825, %v1377
        %v1379 = vrot.slane %v1348, %v1378
        %v1380 = vlaneseq
        %v1381 = vshrl.u32 %v1380, 7
        %v1382 = vsub.s32 %v825, %v1381
        %v1383 = vrot.slane %v1351, %v1382
        %v1384 = vsel %vm858, %v1359, %v1355
        %v1385 = vsel %vm860, %v1363, %v1384
        %v1386 = vsel %vm862, %v1367, %v1385
        %v1387 = vsel %vm864, %v1371, %v1386
        %v1388 = vsel %vm866, %v1375, %v1387
        %v1389 = vsel %vm868, %v1379, %v1388
        %v1390 = vsel %vm870, %v1383, %v1389
        %v1392 = vsel %vm873, %v1390, 0.0
        %1393 = vadd.xlane.f32.xlu0 %v1392
        %v1394 = vpop.xlane.xlu0 %1393
        %v1395 = vrcp.pop %v1394
        %v1397 = vlaneseq
        %v1398 = vshrl.u32 %v1397, 7
        %v1399 = vsub.s32 0, %v1398
        %v1400 = vrot.slane %v1395, %v1399
        %v1401 = vlaneseq
        %v1402 = vshrl.u32 %v1401, 7
        %v1403 = vsub.s32 1, %v1402
        %v1404 = vrot.slane %v1395, %v1403
        %v1405 = vlaneseq
        %v1406 = vshrl.u32 %v1405, 7
        %v1407 = vsub.s32 2, %v1406
        %v1408 = vrot.slane %v1395, %v1407
        %v1409 = vlaneseq
        %v1410 = vshrl.u32 %v1409, 7
        %v1411 = vsub.s32 3, %v1410
        %v1412 = vrot.slane %v1395, %v1411
        %v1413 = vlaneseq
        %v1414 = vshrl.u32 %v1413, 7
        %v1415 = vsub.s32 4, %v1414
        %v1416 = vrot.slane %v1395, %v1415
        %v1417 = vlaneseq
        %v1418 = vshrl.u32 %v1417, 7
        %v1419 = vsub.s32 5, %v1418
        %v1420 = vrot.slane %v1395, %v1419
        %v1421 = vlaneseq
        %v1422 = vshrl.u32 %v1421, 7
        %v1423 = vsub.s32 6, %v1422
        %v1424 = vrot.slane %v1395, %v1423
        %v1425 = vlaneseq
        %v1426 = vshrl.u32 %v1425, 7
        %v1427 = vsub.s32 7, %v1426
        %v1428 = vrot.slane %v1395, %v1427
        %v1437 = vmul.f32 %v1305, %v1400
        %v1438 = vmul.f32 %v1307, %v1404
        %v1439 = vmul.f32 %v1309, %v1408
        %v1440 = vmul.f32 %v1311, %v1412
        %v1441 = vmul.f32 %v1313, %v1416
        %v1442 = vmul.f32 %v1315, %v1420
        %v1443 = vmul.f32 %v1317, %v1424
        %v1444 = vmul.f32 %v1319, %v1428
        %1446 = vset.pattern.permute.xlu0 0
        %1447 = vperm.xlu0 %1446, %v1437
        %v1448 = vpop.permute.xlu0 %1447
        %1451 = vset.pattern.permute.xlu0 0
        %1452 = vperm.xlu0 %1451, %v1438
        %v1453 = vpop.permute.xlu0 %1452
        %1456 = vset.pattern.permute.xlu0 0
        %1457 = vperm.xlu0 %1456, %v1439
        %v1458 = vpop.permute.xlu0 %1457
        %1461 = vset.pattern.permute.xlu0 0
        %1462 = vperm.xlu0 %1461, %v1440
        %v1463 = vpop.permute.xlu0 %1462
        %1466 = vset.pattern.permute.xlu0 0
        %1467 = vperm.xlu0 %1466, %v1441
        %v1468 = vpop.permute.xlu0 %1467
        %1471 = vset.pattern.permute.xlu0 0
        %1472 = vperm.xlu0 %1471, %v1442
        %v1473 = vpop.permute.xlu0 %1472
        %1476 = vset.pattern.permute.xlu0 0
        %1477 = vperm.xlu0 %1476, %v1443
        %v1478 = vpop.permute.xlu0 %1477
        %1481 = vset.pattern.permute.xlu0 0
        %1482 = vperm.xlu0 %1481, %v1444
        %v1483 = vpop.permute.xlu0 %1482
        %v1485 = vmul.f32 %v664, %v1448
        %v1486 = vmul.f32 %v669, %v1453
        %v1487 = vmul.f32 %v674, %v1458
        %v1488 = vmul.f32 %v679, %v1463
        %v1489 = vmul.f32 %v684, %v1468
        %v1490 = vmul.f32 %v689, %v1473
        %v1491 = vmul.f32 %v694, %v1478
        %v1492 = vmul.f32 %v699, %v1483
        %v1493 = vrot.slane %v1485, 4
        %v1494 = vadd.f32 %v1485, %v1493
        %v1495 = vrot.slane %v1494, 2
        %v1496 = vadd.f32 %v1494, %v1495
        %v1497 = vrot.slane %v1496, 1
        %v1498 = vadd.f32 %v1496, %v1497
        %v1499 = vrot.slane %v1486, 4
        %v1500 = vadd.f32 %v1486, %v1499
        %v1501 = vrot.slane %v1500, 2
        %v1502 = vadd.f32 %v1500, %v1501
        %v1503 = vrot.slane %v1502, 1
        %v1504 = vadd.f32 %v1502, %v1503
        %v1505 = vrot.slane %v1487, 4
        %v1506 = vadd.f32 %v1487, %v1505
        %v1507 = vrot.slane %v1506, 2
        %v1508 = vadd.f32 %v1506, %v1507
        %v1509 = vrot.slane %v1508, 1
        %v1510 = vadd.f32 %v1508, %v1509
        %v1511 = vrot.slane %v1488, 4
        %v1512 = vadd.f32 %v1488, %v1511
        %v1513 = vrot.slane %v1512, 2
        %v1514 = vadd.f32 %v1512, %v1513
        %v1515 = vrot.slane %v1514, 1
        %v1516 = vadd.f32 %v1514, %v1515
        %v1517 = vrot.slane %v1489, 4
        %v1518 = vadd.f32 %v1489, %v1517
        %v1519 = vrot.slane %v1518, 2
        %v1520 = vadd.f32 %v1518, %v1519
        %v1521 = vrot.slane %v1520, 1
        %v1522 = vadd.f32 %v1520, %v1521
        %v1523 = vrot.slane %v1490, 4
        %v1524 = vadd.f32 %v1490, %v1523
        %v1525 = vrot.slane %v1524, 2
        %v1526 = vadd.f32 %v1524, %v1525
        %v1527 = vrot.slane %v1526, 1
        %v1528 = vadd.f32 %v1526, %v1527
        %v1529 = vrot.slane %v1491, 4
        %v1530 = vadd.f32 %v1491, %v1529
        %v1531 = vrot.slane %v1530, 2
        %v1532 = vadd.f32 %v1530, %v1531
        %v1533 = vrot.slane %v1532, 1
        %v1534 = vadd.f32 %v1532, %v1533
        %v1535 = vrot.slane %v1492, 4
        %v1536 = vadd.f32 %v1492, %v1535
        %v1537 = vrot.slane %v1536, 2
        %v1538 = vadd.f32 %v1536, %v1537
        %v1539 = vrot.slane %v1538, 1
        %v1540 = vadd.f32 %v1538, %v1539
        %v1549 = vsel %vm858, %v1504, %v1498
        %v1550 = vsel %vm860, %v1510, %v1549
        %v1551 = vsel %vm862, %v1516, %v1550
        %v1552 = vsel %vm864, %v1522, %v1551
        %v1553 = vsel %vm866, %v1528, %v1552
        %v1554 = vsel %vm868, %v1534, %v1553
        %v1555 = vsel %vm870, %v1540, %v1554
        %1557 = vst [vmem:[%s403] sm:$0xff] %v1555
        %s1558 = sand.u32 %s160, 1
        %s1559 = scalar_lea.sflag [#allocation4], %s1558
        %s1560 = sand.u32 %s160, 1
        %s1561 = smul.addr %s1560, 8
        %s1562 = scalar_lea.vmem [#allocation10], %s1561
        %s1563 = sand.u32 %s32, 1
        %s1564 = scalar_lea.sflag [#allocation12], %s1563
        %s1565 = sand.u32 %s186, 1
        %s1566 = smul.addr %s1565, 8
        %s1567 = scalar_lea.vmem [#allocation11], %s1566
        %s1568 = sand.u32 %s32, 1
        %s1569 = scalar_lea.sflag [#allocation12], %s1568
        %s1570 = sand.u32 %s212, 1
        %s1571 = smul.addr %s1570, 8
        %s1572 = scalar_lea.vmem [#allocation13], %s1571
        // Predicated region
        $region57: #{tpu_custom_call.1} parent=39 // pred_check
          %p1573 = pneg %p170
        $region58: #{tpu_custom_call.1} parent=39 // pred_check_branch
          %1575 = sbr.rel (%p1573) target = $region60
        $region59: #{tpu_custom_call.1} parent=39 // pred_region
          %s1577 = ssub.s32 128, 128
          %1578 = vsyncadd %s1559, %s1577
          %s1579 = smul.addr %s32, 128
          %s1580 = scalar_lea.hbm %s5, %s1579
          %s1582 = sshll.u32 %s1562, 4
          %s1583 = int_to_ptr.vmem [resolvable:$true] %s1582
          %1585 = dma.vmem_to_hbm [thread:$0]  %s1583, 128, %s1580, %s1559
        $region60: #{tpu_custom_call.1} parent=39 // pred_fallthru
          _
        // Predicated region
        $region61: #{tpu_custom_call.1} parent=39 // pred_check
          %p1586 = pneg %p196
        $region62: #{tpu_custom_call.1} parent=39 // pred_check_branch
          %1588 = sbr.rel (%p1586) target = $region64
        $region63: #{tpu_custom_call.1} parent=39 // pred_region
          %s1590 = ssub.s32 128, 128
          %1591 = vsyncadd %s1564, %s1590
          %s1592 = smul.addr %s32, 128
          %s1593 = scalar_lea.hbm %s6, %s1592
          %s1595 = sshll.u32 %s1567, 4
          %s1596 = int_to_ptr.vmem [resolvable:$true] %s1595
          %1598 = dma.vmem_to_hbm [thread:$0]  %s1596, 128, %s1593, %s1564
        $region64: #{tpu_custom_call.1} parent=39 // pred_fallthru
          _
        // Predicated region
        $region65: #{tpu_custom_call.1} parent=39 // pred_check
          %p1599 = pneg %p222
        $region66: #{tpu_custom_call.1} parent=39 // pred_check_branch
          %1601 = sbr.rel (%p1599) target = $region68
        $region67: #{tpu_custom_call.1} parent=39 // pred_region
          %s1603 = ssub.s32 128, 128
          %1604 = vsyncadd %s1569, %s1603
          %s1605 = smul.addr %s32, 128
          %s1606 = scalar_lea.hbm %s7, %s1605
          %s1608 = sshll.u32 %s1572, 4
          %s1609 = int_to_ptr.vmem [resolvable:$true] %s1608
          %1611 = dma.vmem_to_hbm [thread:$0]  %s1609, 128, %s1606, %s1569
        $region68: #{tpu_custom_call.1} parent=39 // pred_fallthru
          _
      $region40: #{tpu_custom_call.1} parent=5 // pred_fallthru
        _
      %p1612 = scmp.le.s32.totalorder 2, %s27
      // Predicated region
      $region69: #{tpu_custom_call.1} parent=5 // pred_check
        %p1613 = pneg %p1612
      $region70: #{tpu_custom_call.1} parent=5 // pred_check_branch
        %1615 = sbr.rel (%p1613) target = $region72
      $region71: #{tpu_custom_call.1} parent=5 // pred_region
        %s1616 = ssub.s32 %s27, 2
        // Predicated region
        $region73: #{tpu_custom_call.1} parent=71 // pred_check
          %p1617 = pneg %p176
        $region74: #{tpu_custom_call.1} parent=71 // pred_check_branch
          %1619 = sbr.rel (%p1617) target = $region76
        $region75: #{tpu_custom_call.1} parent=71 // pred_region
          %s1620 = sand.u32 %s161, 1
          %s1621 = scalar_lea.sflag [#allocation4], %s1620
          %s1622 = sand.u32 %s161, 1
          %s1623 = smul.addr %s1622, 8
          %s1624 = scalar_lea.vmem [#allocation10], %s1623
          %1625 = dma.done %s1621, 128
        $region76: #{tpu_custom_call.1} parent=71 // pred_fallthru
          _
        // Predicated region
        $region77: #{tpu_custom_call.1} parent=71 // pred_check
          %p1626 = pneg %p202
        $region78: #{tpu_custom_call.1} parent=71 // pred_check_branch
          %1628 = sbr.rel (%p1626) target = $region80
        $region79: #{tpu_custom_call.1} parent=71 // pred_region
          %s1629 = sand.u32 %s33, 1
          %s1630 = scalar_lea.sflag [#allocation12], %s1629
          %s1631 = sand.u32 %s187, 1
          %s1632 = smul.addr %s1631, 8
          %s1633 = scalar_lea.vmem [#allocation11], %s1632
          %1634 = dma.done %s1630, 128
        $region80: #{tpu_custom_call.1} parent=71 // pred_fallthru
          _
        // Predicated region
        $region81: #{tpu_custom_call.1} parent=71 // pred_check
          %p1635 = pneg %p228
        $region82: #{tpu_custom_call.1} parent=71 // pred_check_branch
          %1637 = sbr.rel (%p1635) target = $region84
        $region83: #{tpu_custom_call.1} parent=71 // pred_region
          %s1638 = sand.u32 %s33, 1
          %s1639 = scalar_lea.sflag [#allocation12], %s1638
          %s1640 = sand.u32 %s213, 1
          %s1641 = smul.addr %s1640, 8
          %s1642 = scalar_lea.vmem [#allocation13], %s1641
          %1643 = dma.done %s1639, 128
        $region84: #{tpu_custom_call.1} parent=71 // pred_fallthru
          _
      $region72: #{tpu_custom_call.1} parent=5 // pred_fallthru
        _
    $region6: #{tpu_custom_call.1} parent=1 // loop_footer
      %s31 = sadd.s32 1, %s27
    $region7: #{tpu_custom_call.1} parent=1 // loop_footer_branch
      %26 = sbr.rel target = $region3
    $region8: #{tpu_custom_call.1} parent=1 // loop_exit
      _
    %1644 = vsyncpa [#allocation3], 1
    %s1645 = scalar_lea.sflag [#allocation3], 1
    %1646 = vsyncpa %s1645, 1
    %1647 = vsyncpa [#allocation6], 1
    %s1648 = scalar_lea.sflag [#allocation6], 1
    %1649 = vsyncpa %s1648, 1
    %1650 = vsyncpa [#allocation9], 1
    %1651 = vsyncpa [#allocation4], 1
    %s1652 = scalar_lea.sflag [#allocation4], 1
    %1653 = vsyncpa %s1652, 1
    %1654 = vsyncpa [#allocation12], 1
    %s1655 = scalar_lea.sflag [#allocation12], 1
    %1656 = vsyncpa %s1655, 1

</llo_original>
